<compile_context>
chip_gen: v5e
topology: v5e:2x2
jax: 0.10.0
libtpu: 0.0.40
codegen_flags: <defaults>
</compile_context>

<pallas_src>
import functools

import jax
import jax.numpy as jnp
from jax.experimental import pallas as pl
from jax.experimental.pallas import tpu as pltpu


def _round_up(n, m):
    return ((n + m - 1) // m) * m


def _pad2(a, r, c):
    return jnp.pad(a, ((0, r - a.shape[0]), (0, c - a.shape[1])))


def _pad1(a, n):
    return jnp.pad(a, ((0, n - a.shape[0]),))


def _device_tile_config():
    """Generation-aware (tile_cap, scoped_vmem_budget).
    v5e/v6e have 128 MiB physical VMEM -> 1024-wide tiles, 64 MiB budget.
    v7x (64 MiB) or unknown -> conservative 512 / 32 MiB."""
    vmem_bytes = None
    try:
        info = pltpu.get_tpu_info()
        for attr in ("vmem_capacity_bytes", "vmem_bytes"):
            vmem_bytes = getattr(info, attr, None)
            if vmem_bytes is not None:
                break
    except Exception:
        vmem_bytes = None
    if vmem_bytes is not None and vmem_bytes >= 100 * 1024 * 1024:
        return 1024, 64 * 1024 * 1024
    return 512, 32 * 1024 * 1024


def _choose_row_tile(n, cap):
    """Row/col tile = min(cap, round_up(n,128)); N is then padded to a multiple of it,
    so the grid never falls back to tiny tiles for awkward graph sizes."""
    return min(cap, _round_up(n, 128))


def _slab_is_resident(n_pad, feat, vmem_limit, tm):
    """Can the (n_pad, feat) bf16 activation slab stay fully VMEM-resident?"""
    need = n_pad * feat * 2 + 3 * tm * tm * 2 + tm * feat * 4 + 4 * tm * feat * 2
    return need <= vmem_limit - 8 * 1024 * 1024


def _a_spec(tm, tk, n_tiles_k):
    """A_hat tile BlockSpec; triple-buffer when the reduction grid is deep enough."""
    index_map = lambda i, k: (i, k)
    if n_tiles_k >= 3 and hasattr(pl, "Buffered"):
        try:
            return pl.BlockSpec((tm, tk), index_map, pipeline_mode=pl.Buffered(3))
        except TypeError:
            pass
    return pl.BlockSpec((tm, tk), index_map)


# ---------------------------------------------------------------------------
# Kernels
# ---------------------------------------------------------------------------

def feat_transform_kernel(x_ref, w_ref, o_ref):
    """XW = X @ W  (bf16 MXU operands, f32 accumulate, bf16 lane-dense store)."""
    o_ref[...] = jnp.dot(x_ref[...], w_ref[...],
                         preferred_element_type=jnp.float32).astype(o_ref.dtype)


def propagate_transform_kernel(a_ref, xw_ref, b_ref, w2_ref, o_ref, acc_ref,
                               *, tk, resident):
    """Z2 = relu(A_hat @ XW1 + b1) @ W2, tiled over (row tiles, k tiles)."""
    k = pl.program_id(1)

    @pl.when(k == 0)
    def _init():
        acc_ref[...] = jnp.zeros_like(acc_ref)

    if resident:
        xw = xw_ref[pl.ds(pl.multiple_of(k * tk, 128), tk), :]   # resident slab, slice k-chunk
    else:
        xw = xw_ref[...]                                          # streamed k-slab

    acc_ref[...] += jnp.dot(a_ref[...], xw, preferred_element_type=jnp.float32)

    @pl.when(k == pl.num_programs(1) - 1)
    def _finalize():
        h1 = jnp.maximum(acc_ref[...] + b_ref[...], 0.0)          # ReLU activation (f32)
        z2 = jnp.dot(h1.astype(jnp.bfloat16), w2_ref[...],
                     preferred_element_type=jnp.float32)
        o_ref[...] = z2.astype(o_ref.dtype)


def propagate_classify_loss_kernel(a_ref, z_ref, b2_ref, w0_ref, b0_ref,
                                   w1_ref, b1_ref, yoh_ref, loss_ref, acc_ref,
                                   *, tk, resident):
    """Per-row-tile partial of sum( yoh_scaled * (lse(logits) - logits) ), where
       h2 = relu(A_hat @ Z2 + b2), t = leaky_relu(h2 @ Wfc0 + bfc0),
       logits = t @ Wfc1 + bfc1.  preds never leave VMEM."""
    k = pl.program_id(1)

    @pl.when(k == 0)
    def _init():
        acc_ref[...] = jnp.zeros_like(acc_ref)
        loss_ref[...] = jnp.zeros_like(loss_ref)

    if resident:
        z = z_ref[pl.ds(pl.multiple_of(k * tk, 128), tk), :]
    else:
        z = z_ref[...]

    acc_ref[...] += jnp.dot(a_ref[...], z, preferred_element_type=jnp.float32)

    @pl.when(k == pl.num_programs(1) - 1)
    def _finalize():
        h2 = jnp.maximum(acc_ref[...] + b2_ref[...], 0.0)         # ReLU (f32)
        t = jnp.dot(h2.astype(jnp.bfloat16), w0_ref[...],
                    preferred_element_type=jnp.float32) + b0_ref[...]
        t = jnp.where(t > 0, t, 0.01 * t)                         # F.leaky_relu (slope 0.01)
        logits = jnp.dot(t.astype(jnp.bfloat16), w1_ref[...],
                         preferred_element_type=jnp.float32) + b1_ref[...]
        m = jnp.max(logits, axis=-1, keepdims=True)
        lse = m + jnp.log(jnp.sum(jnp.exp(logits - m), axis=-1, keepdims=True))
        # yoh_ref already carries mask * (1 / num_masked), so this sum IS the mean CE part.
        part = jnp.sum(yoh_ref[...] * (lse - logits))
        loss_ref[...] = jnp.broadcast_to(part, loss_ref.shape).astype(loss_ref.dtype)


# ---------------------------------------------------------------------------
# Wrappers (tiled pallas_calls)
# ---------------------------------------------------------------------------

def feat_transform(x, w, *, tm, vmem_limit):
    n, fin = x.shape
    fout = w.shape[1]
    cost = pl.CostEstimate(flops=2 * n * fin * fout, transcendentals=0,
                           bytes_accessed=int(x.size * 2 + w.size * 2 + n * fout * 2))
    return pl.pallas_call(
        feat_transform_kernel,
        out_shape=jax.ShapeDtypeStruct((n, fout), jnp.bfloat16),
        grid=(n // tm,),
        in_specs=[pl.BlockSpec((tm, fin), lambda i: (i, 0)),
                  pl.BlockSpec((fin, fout), lambda i: (0, 0))],
        out_specs=pl.BlockSpec((tm, fout), lambda i: (i, 0)),
        compiler_params=pltpu.CompilerParams(
            dimension_semantics=("parallel",), vmem_limit_bytes=vmem_limit),
        cost_estimate=cost,
    )(x, w)


def propagate_transform(a, xw, b, w2, *, tm, tk, vmem_limit, resident):
    n = a.shape[0]
    f = xw.shape[1]
    h = w2.shape[1]
    n_tiles_m, n_tiles_k = n // tm, n // tk
    xw_bytes = n * f * 2 if resident else n_tiles_m * n * f * 2
    cost = pl.CostEstimate(
        flops=2 * n * n * f + 2 * n * f * h, transcendentals=0,
        bytes_accessed=int(n * n * 2 + xw_bytes + n * h * 2 + f * h * 2))
    xw_spec = (pl.BlockSpec((n, f), lambda i, k: (0, 0)) if resident
               else pl.BlockSpec((tk, f), lambda i, k: (k, 0)))
    kern = functools.partial(propagate_transform_kernel, tk=tk, resident=resident)
    return pl.pallas_call(
        kern,
        out_shape=jax.ShapeDtypeStruct((n, h), jnp.bfloat16),
        grid=(n_tiles_m, n_tiles_k),
        in_specs=[_a_spec(tm, tk, n_tiles_k),                     # A_hat tile
                  xw_spec,                                        # XW1 (resident or k-slab)
                  pl.BlockSpec((1, f), lambda i, k: (0, 0)),      # b1
                  pl.BlockSpec((f, h), lambda i, k: (0, 0))],     # W2
        out_specs=pl.BlockSpec((tm, h), lambda i, k: (i, 0)),
        scratch_shapes=[pltpu.VMEM((tm, f), jnp.float32)],
        compiler_params=pltpu.CompilerParams(
            dimension_semantics=("parallel", "arbitrary"),
            vmem_limit_bytes=vmem_limit),
        cost_estimate=cost,
    )(a, xw, b, w2)


def propagate_classify_loss(a, z, b2, w0, b0, w1, b1, yoh, *, tm, tk, vmem_limit, resident):
    n = a.shape[0]
    h = z.shape[1]
    c = w1.shape[1]
    n_tiles_m, n_tiles_k = n // tm, n // tk
    z_bytes = n * h * 2 if resident else n_tiles_m * n * h * 2
    cost = pl.CostEstimate(
        flops=2 * n * n * h + 2 * n * h * h + 2 * n * h * c,
        transcendentals=n * (c + 1),
        bytes_accessed=int(n * n * 2 + z_bytes + n * c * 4 + h * h * 2 + h * c * 2
                           + n_tiles_m * 8 * 128 * 4))
    z_spec = (pl.BlockSpec((n, h), lambda i, k: (0, 0)) if resident
              else pl.BlockSpec((tk, h), lambda i, k: (k, 0)))
    kern = functools.partial(propagate_classify_loss_kernel, tk=tk, resident=resident)
    return pl.pallas_call(
        kern,
        out_shape=jax.ShapeDtypeStruct((n_tiles_m, 8, 128), jnp.float32),  # per-row-tile partials
        grid=(n_tiles_m, n_tiles_k),
        in_specs=[_a_spec(tm, tk, n_tiles_k),                     # A_hat tile
                  z_spec,                                         # Z2 (resident or k-slab)
                  pl.BlockSpec((1, h), lambda i, k: (0, 0)),      # b2
                  pl.BlockSpec((h, h), lambda i, k: (0, 0)),      # W_fc0
                  pl.BlockSpec((1, h), lambda i, k: (0, 0)),      # b_fc0
                  pl.BlockSpec((h, c), lambda i, k: (0, 0)),      # W_fc1
                  pl.BlockSpec((1, c), lambda i, k: (0, 0)),      # b_fc1
                  pl.BlockSpec((tm, c), lambda i, k: (i, 0))],    # masked/scaled one-hot
        out_specs=pl.BlockSpec((1, 8, 128), lambda i, k: (i, 0, 0)),
        scratch_shapes=[pltpu.VMEM((tm, h), jnp.float32)],
        compiler_params=pltpu.CompilerParams(
            dimension_semantics=("parallel", "arbitrary"),        # row tiles split across cores
            vmem_limit_bytes=vmem_limit),
        cost_estimate=cost,
    )(a, z, b2, w0, b0, w1, b1, yoh)


# ---------------------------------------------------------------------------
# Plain-JAX glue
# ---------------------------------------------------------------------------

def build_normalized_adjacency(edge_index, num_nodes):
    """GCN normalization: A_hat = D^{-1/2} (A + I) D^{-1/2}  (dense, built ONCE per graph).
    Edge direction follows PyG message flow (aggregate x[src] into out[dst])."""
    src, dst = edge_index[0], edge_index[1]
    adj = jnp.zeros((num_nodes, num_nodes), jnp.float32).at[dst, src].set(1.0)
    adj = jnp.maximum(adj, jnp.eye(num_nodes, dtype=jnp.float32))  # add self loops
    deg = jnp.sum(adj, axis=1)                                     # >= 1, no div-by-zero
    d = jax.lax.rsqrt(deg)
    # TODO(synk): for large graphs replace the dense A_hat with CSR + scalar-prefetch
    #             gather (PrefetchScalarGridSpec) to avoid the O(N^2) propagate.
    return d[:, None] * adj * d[None, :]


def prepare_graph(x, edge_index, num_nodes, tm):
    """One-time per-graph preprocessing (keep OUT of the jitted training step):
    dense normalized adjacency, row/col padding to a multiple of the row tile,
    bf16 cast — so the per-step kernels only *stream* A_hat, never re-pad/convert it."""
    a_hat = build_normalized_adjacency(edge_index, num_nodes)
    n_pad = _round_up(num_nodes, tm)
    a_p = _pad2(a_hat, n_pad, n_pad).astype(jnp.bfloat16)
    x_p = _pad2(x, n_pad, x.shape[1]).astype(jnp.bfloat16)
    return a_p, x_p


def supervised_model_loss(params, x_p, a_p, y, train_mask, *, tm, vmem_limit):
    """Training-mode forward of SupervisedModel: masked mean cross-entropy loss.
    x_p / a_p must already be padded to a multiple of tm and cast to bf16 (prepare_graph)."""
    n_pad = a_p.shape[0]
    assert n_pad % tm == 0
    f_in = x_p.shape[1]
    f2 = params["gcn1_w"].shape[1]      # 2 * hidden
    hid = params["gcn2_w"].shape[1]     # hidden
    nc = params["fc1_w"].shape[1]       # nb_classes

    f2_pad = _round_up(f2, 128)
    h_pad = _round_up(hid, 128)
    tk = tm

    w1 = _pad2(params["gcn1_w"], f_in, f2_pad).astype(jnp.bfloat16)
    b1 = _pad1(params["gcn1_b"], f2_pad).astype(jnp.float32).reshape(1, -1)
    w2 = _pad2(params["gcn2_w"], f2_pad, h_pad).astype(jnp.bfloat16)
    b2 = _pad1(params["gcn2_b"], h_pad).astype(jnp.float32).reshape(1, -1)
    w0 = _pad2(params["fc0_w"], h_pad, h_pad).astype(jnp.bfloat16)
    b0 = _pad1(params["fc0_b"], h_pad).astype(jnp.float32).reshape(1, -1)
    wc = _pad2(params["fc1_w"], h_pad, nc).astype(jnp.bfloat16)
    bc = params["fc1_b"].astype(jnp.float32).reshape(1, -1)

    # Fold mask and 1/num_masked into the one-hot targets: removes the lane-sparse
    # (N,1) mask input and the in-kernel divide; max(.,1) guards an all-False mask
    # (loss becomes 0 instead of PyTorch's NaN — intentional).
    mask_f = train_mask.astype(jnp.float32)
    cnt = jnp.maximum(jnp.sum(mask_f), 1.0)
    yoh = jax.nn.one_hot(y, nc, dtype=jnp.float32) * (mask_f / cnt)[:, None]
    yoh_p = _pad2(yoh, n_pad, nc)

    # TODO(synk): optionally fuse K0 into K1 when in_channels is small, and use fp8 A_hat
    #             on v7x (native fp8 MXU) to halve the dominant HBM stream.
    xw1 = feat_transform(x_p, w1, tm=tm, vmem_limit=vmem_limit)           # (n_pad, f2_pad) bf16
    z2 = propagate_transform(
        a_p, xw1, b1, w2, tm=tm, tk=tk, vmem_limit=vmem_limit,
        resident=_slab_is_resident(n_pad, f2_pad, vmem_limit, tm))        # (n_pad, h_pad) bf16
    partials = propagate_classify_loss(
        a_p, z2, b2, w0, b0, wc, bc, yoh_p, tm=tm, tk=tk, vmem_limit=vmem_limit,
        resident=_slab_is_resident(n_pad, h_pad, vmem_limit, tm))         # (n_tiles, 8, 128) f32
    return jnp.sum(partials[:, 0, 0])


def init_params(key, in_channels, hidden_channels, nb_classes):
    ks = jax.random.split(key, 6)
    scale = lambda fi: 1.0 / jnp.sqrt(jnp.float32(fi))
    return {
        # GCNConv(in_channels, 2*hidden)
        "gcn1_w": jax.random.normal(ks[0], (in_channels, 2 * hidden_channels), jnp.float32) * scale(in_channels),
        "gcn1_b": jnp.zeros((2 * hidden_channels,), jnp.float32),
        # GCNConv(2*hidden, hidden)
        "gcn2_w": jax.random.normal(ks[1], (2 * hidden_channels, hidden_channels), jnp.float32) * scale(2 * hidden_channels),
        "gcn2_b": jnp.zeros((hidden_channels,), jnp.float32),
        # LogReg.fc0: Linear(hidden, hidden)
        "fc0_w": jax.random.normal(ks[2], (hidden_channels, hidden_channels), jnp.float32) * scale(hidden_channels),
        "fc0_b": jax.random.normal(ks[3], (hidden_channels,), jnp.float32) * scale(hidden_channels),
        # LogReg.fc1: Linear(hidden, nb_classes)
        "fc1_w": jax.random.normal(ks[4], (hidden_channels, nb_classes), jnp.float32) * scale(hidden_channels),
        "fc1_b": jax.random.normal(ks[5], (nb_classes,), jnp.float32) * scale(hidden_channels),
    }


if __name__ == "__main__":
    key = jax.random.PRNGKey(0)
    k_x, k_e, k_y, k_m, k_p = jax.random.split(key, 5)

    N = 16            # nodes
    E = 40            # edges
    IN_CH = 8         # in_channels
    HIDDEN = 32       # hidden_channels
    NB_CLASSES = 4    # nb_classes

    x = jax.random.normal(k_x, (N, IN_CH), jnp.float32)
    edge_index = jax.random.randint(k_e, (2, E), 0, N, jnp.int32)
    y = jax.random.randint(k_y, (N,), 0, NB_CLASSES, jnp.int32)
    train_mask = jax.random.bernoulli(k_m, 0.6, (N,)).at[0].set(True)

    params = init_params(k_p, IN_CH, HIDDEN, NB_CLASSES)

    # Static, generation-aware tiling decisions (outside the jitted step).
    tile_cap, vmem_limit = _device_tile_config()
    tm = _choose_row_tile(N, tile_cap)

    # Per-graph constants: adjacency build + pad + bf16 cast done ONCE, not per step.
    a_p, x_p = prepare_graph(x, edge_index, N, tm)

    loss_fn = jax.jit(functools.partial(supervised_model_loss, tm=tm, vmem_limit=vmem_limit))
    loss = jax.block_until_ready(loss_fn(params, x_p, a_p, y, train_mask))
    assert jnp.isfinite(loss)
    print("KERNEL_OK")
</pallas_src>

<mosaic_0001>
module attributes {stable_mosaic.version = 11 : i64} {
  func.func @feat_transform_kernel(%arg0: i32, %arg1: memref<128x8xbf16, #tpu.memory_space<vmem>>, %arg2: memref<8x128xbf16, #tpu.memory_space<vmem>>, %arg3: memref<128x128xbf16, #tpu.memory_space<vmem>>) attributes {dimension_semantics = [#tpu.dimension_semantics<parallel>], iteration_bounds = array<i64: 1>, scalar_prefetch = 0 : i64, scratch_operands = 0 : i64, tpu.core_type = #tpu.core_type<tc>, window_params = [{transform_indices = @transform_0, window_bounds = array<i64: 128, 8>}, {pipeline_mode = #tpu.pipeline_mode<synchronous>, transform_indices = @transform_1, window_bounds = array<i64: 8, 128>}, {transform_indices = @transform_2, window_bounds = array<i64: 128, 128>}]} {
    %c0 = arith.constant 0 : index
    %c0_0 = arith.constant 0 : index
    %0 = vector.load %arg1[%c0, %c0_0] : memref<128x8xbf16, #tpu.memory_space<vmem>>, vector<128x8xbf16>
    %c0_1 = arith.constant 0 : index
    %c0_2 = arith.constant 0 : index
    %1 = vector.load %arg2[%c0_1, %c0_2] : memref<8x128xbf16, #tpu.memory_space<vmem>>, vector<8x128xbf16>
    %cst = arith.constant dense<0.000000e+00> : vector<128x128xf32>
    %2 = tpu.matmul %0, %1, %cst {dimension_numbers = #tpu.dot_dimension_numbers<[1], [0], [0], [1], [0, 0, 1, 1], [], []>} : vector<128x8xbf16>, vector<8x128xbf16>, vector<128x128xf32> -> vector<128x128xf32>
    %3 = arith.truncf %2 : vector<128x128xf32> to vector<128x128xbf16>
    %c0_3 = arith.constant 0 : index
    %c0_4 = arith.constant 0 : index
    %4 = vector.load %arg3[%c0_3, %c0_4] : memref<128x128xbf16, #tpu.memory_space<vmem>>, vector<128x128xbf16>
    tpu.vector_store %arg3[%c0_3, %c0_4], %3 {strides = array<i32>} : memref<128x128xbf16, #tpu.memory_space<vmem>>, vector<128x128xbf16>,
    return
  }
  func.func @transform_0(%arg0: i32) -> (i32, i32) {
    %c0_i32 = arith.constant 0 : i32
    %c0_i32_0 = arith.constant 0 : i32
    return %arg0, %c0_i32 : i32, i32
  }
  func.func @transform_1(%arg0: i32) -> (i32, i32) {
    %c0_i32 = arith.constant 0 : i32
    %c0_i32_0 = arith.constant 0 : i32
    %c0_i32_1 = arith.constant 0 : i32
    return %c0_i32, %c0_i32_0 : i32, i32
  }
  func.func @transform_2(%arg0: i32) -> (i32, i32) {
    %c0_i32 = arith.constant 0 : i32
    %c0_i32_0 = arith.constant 0 : i32
    return %arg0, %c0_i32 : i32, i32
  }
}

module attributes {stable_mosaic.version = 11 : i64} {
  func.func @propagate_transform_kernel(%arg0: i32, %arg1: i32, %arg2: memref<128x128xbf16, #tpu.memory_space<vmem>>, %arg3: memref<128x128xbf16, #tpu.memory_space<vmem>>, %arg4: memref<1x128xf32, #tpu.memory_space<vmem>>, %arg5: memref<128x128xbf16, #tpu.memory_space<vmem>>, %arg6: memref<128x128xbf16, #tpu.memory_space<vmem>>, %arg7: memref<128x128xf32, #tpu.memory_space<vmem>>) attributes {dimension_semantics = [#tpu.dimension_semantics<parallel>, #tpu.dimension_semantics<arbitrary>], iteration_bounds = array<i64: 1, 1>, scalar_prefetch = 0 : i64, scratch_operands = 1 : i64, tpu.core_type = #tpu.core_type<tc>, window_params = [{transform_indices = @transform_0, window_bounds = array<i64: 128, 128>}, {pipeline_mode = #tpu.pipeline_mode<synchronous>, transform_indices = @transform_1, window_bounds = array<i64: 128, 128>}, {pipeline_mode = #tpu.pipeline_mode<synchronous>, transform_indices = @transform_2, window_bounds = array<i64: 1, 128>}, {pipeline_mode = #tpu.pipeline_mode<synchronous>, transform_indices = @transform_3, window_bounds = array<i64: 128, 128>}, {transform_indices = @transform_4, window_bounds = array<i64: 128, 128>}]} {
    %c0_i32 = arith.constant 0 : i32
    %0 = arith.cmpi eq, %arg1, %c0_i32 : i32
    %1 = arith.extui %0 : i1 to i32
    %c0_i32_0 = arith.constant 0 : i32
    %2 = arith.cmpi ne, %1, %c0_i32_0 : i32
    scf.if %2 {
      %cst_9 = arith.constant 0.000000e+00 : f32
      %15 = vector.broadcast %cst_9 : f32 to vector<128x128xf32>
      %c0_10 = arith.constant 0 : index
      %c0_11 = arith.constant 0 : index
      %16 = vector.load %arg7[%c0_10, %c0_11] : memref<128x128xf32, #tpu.memory_space<vmem>>, vector<128x128xf32>
      tpu.vector_store %arg7[%c0_10, %c0_11], %15 {strides = array<i32>} : memref<128x128xf32, #tpu.memory_space<vmem>>, vector<128x128xf32>,
    } else {
    }
    %c128_i32 = arith.constant 128 : i32
    %3 = arith.muli %arg1, %c128_i32 : i32
    %4 = tpu.assume_multiple %3, 128 : i32
    %5 = arith.index_cast %4 : i32 to index
    %c0 = arith.constant 0 : index
    %6 = vector.load %arg3[%5, %c0] : memref<128x128xbf16, #tpu.memory_space<vmem>>, vector<128x128xbf16>
    %c0_1 = arith.constant 0 : index
    %c0_2 = arith.constant 0 : index
    %7 = vector.load %arg7[%c0_1, %c0_2] : memref<128x128xf32, #tpu.memory_space<vmem>>, vector<128x128xf32>
    %c0_3 = arith.constant 0 : index
    %c0_4 = arith.constant 0 : index
    %8 = vector.load %arg2[%c0_3, %c0_4] : memref<128x128xbf16, #tpu.memory_space<vmem>>, vector<128x128xbf16>
    %cst = arith.constant dense<0.000000e+00> : vector<128x128xf32>
    %9 = tpu.matmul %8, %6, %cst {dimension_numbers = #tpu.dot_dimension_numbers<[1], [0], [0], [1], [0, 0, 1, 1], [], []>} : vector<128x128xbf16>, vector<128x128xbf16>, vector<128x128xf32> -> vector<128x128xf32>
    %10 = arith.addf %7, %9 : vector<128x128xf32>
    %c0_5 = arith.constant 0 : index
    %c0_6 = arith.constant 0 : index
    %11 = vector.load %arg7[%c0_5, %c0_6] : memref<128x128xf32, #tpu.memory_space<vmem>>, vector<128x128xf32>
    tpu.vector_store %arg7[%c0_5, %c0_6], %10 {strides = array<i32>} : memref<128x128xf32, #tpu.memory_space<vmem>>, vector<128x128xf32>,
    %c0_i32_7 = arith.constant 0 : i32
    %12 = arith.cmpi eq, %arg1, %c0_i32_7 : i32
    %13 = arith.extui %12 : i1 to i32
    %c0_i32_8 = arith.constant 0 : i32
    %14 = arith.cmpi ne, %13, %c0_i32_8 : i32
    scf.if %14 {
      %c0_9 = arith.constant 0 : index
      %c0_10 = arith.constant 0 : index
      %15 = vector.load %arg7[%c0_9, %c0_10] : memref<128x128xf32, #tpu.memory_space<vmem>>, vector<128x128xf32>
      %c0_11 = arith.constant 0 : index
      %c0_12 = arith.constant 0 : index
      %16 = vector.load %arg4[%c0_11, %c0_12] : memref<1x128xf32, #tpu.memory_space<vmem>>, vector<1x128xf32>
      %17 = vector.broadcast %16 : vector<1x128xf32> to vector<128x128xf32>
      %18 = arith.addf %15, %17 : vector<128x128xf32>
      %cst_13 = arith.constant 0.000000e+00 : f32
      %19 = vector.broadcast %cst_13 : f32 to vector<128x128xf32>
      %20 = arith.maximumf %18, %19 : vector<128x128xf32>
      %21 = arith.truncf %20 : vector<128x128xf32> to vector<128x128xbf16>
      %c0_14 = arith.constant 0 : index
      %c0_15 = arith.constant 0 : index
      %22 = vector.load %arg5[%c0_14, %c0_15] : memref<128x128xbf16, #tpu.memory_space<vmem>>, vector<128x128xbf16>
      %cst_16 = arith.constant dense<0.000000e+00> : vector<128x128xf32>
      %23 = tpu.matmul %21, %22, %cst_16 {dimension_numbers = #tpu.dot_dimension_numbers<[1], [0], [0], [1], [0, 0, 1, 1], [], []>} : vector<128x128xbf16>, vector<128x128xbf16>, vector<128x128xf32> -> vector<128x128xf32>
      %24 = arith.truncf %23 : vector<128x128xf32> to vector<128x128xbf16>
      %c0_17 = arith.constant 0 : index
      %c0_18 = arith.constant 0 : index
      %25 = vector.load %arg6[%c0_17, %c0_18] : memref<128x128xbf16, #tpu.memory_space<vmem>>, vector<128x128xbf16>
      tpu.vector_store %arg6[%c0_17, %c0_18], %24 {strides = array<i32>} : memref<128x128xbf16, #tpu.memory_space<vmem>>, vector<128x128xbf16>,
    } else {
    }
    return
  }
  func.func @transform_0(%arg0: i32, %arg1: i32) -> (i32, i32) {
    %c0_i32 = arith.constant 0 : i32
    return %arg0, %arg1 : i32, i32
  }
  func.func @transform_1(%arg0: i32, %arg1: i32) -> (i32, i32) {
    %c0_i32 = arith.constant 0 : i32
    %c0_i32_0 = arith.constant 0 : i32
    %c0_i32_1 = arith.constant 0 : i32
    return %c0_i32, %c0_i32_0 : i32, i32
  }
  func.func @transform_2(%arg0: i32, %arg1: i32) -> (i32, i32) {
    %c0_i32 = arith.constant 0 : i32
    %c0_i32_0 = arith.constant 0 : i32
    %c0_i32_1 = arith.constant 0 : i32
    return %c0_i32, %c0_i32_0 : i32, i32
  }
  func.func @transform_3(%arg0: i32, %arg1: i32) -> (i32, i32) {
    %c0_i32 = arith.constant 0 : i32
    %c0_i32_0 = arith.constant 0 : i32
    %c0_i32_1 = arith.constant 0 : i32
    return %c0_i32, %c0_i32_0 : i32, i32
  }
  func.func @transform_4(%arg0: i32, %arg1: i32) -> (i32, i32) {
    %c0_i32 = arith.constant 0 : i32
    %c0_i32_0 = arith.constant 0 : i32
    return %arg0, %c0_i32 : i32, i32
  }
}

module attributes {stable_mosaic.version = 11 : i64} {
  func.func @propagate_classify_loss_kernel(%arg0: i32, %arg1: i32, %arg2: memref<128x128xbf16, #tpu.memory_space<vmem>>, %arg3: memref<128x128xbf16, #tpu.memory_space<vmem>>, %arg4: memref<1x128xf32, #tpu.memory_space<vmem>>, %arg5: memref<128x128xbf16, #tpu.memory_space<vmem>>, %arg6: memref<1x128xf32, #tpu.memory_space<vmem>>, %arg7: memref<128x4xbf16, #tpu.memory_space<vmem>>, %arg8: memref<1x4xf32, #tpu.memory_space<vmem>>, %arg9: memref<128x4xf32, #tpu.memory_space<vmem>>, %arg10: memref<1x8x128xf32, #tpu.memory_space<vmem>>, %arg11: memref<128x128xf32, #tpu.memory_space<vmem>>) attributes {dimension_semantics = [#tpu.dimension_semantics<parallel>, #tpu.dimension_semantics<arbitrary>], iteration_bounds = array<i64: 1, 1>, scalar_prefetch = 0 : i64, scratch_operands = 1 : i64, tpu.core_type = #tpu.core_type<tc>, window_params = [{transform_indices = @transform_0, window_bounds = array<i64: 128, 128>}, {pipeline_mode = #tpu.pipeline_mode<synchronous>, transform_indices = @transform_1, window_bounds = array<i64: 128, 128>}, {pipeline_mode = #tpu.pipeline_mode<synchronous>, transform_indices = @transform_2, window_bounds = array<i64: 1, 128>}, {pipeline_mode = #tpu.pipeline_mode<synchronous>, transform_indices = @transform_3, window_bounds = array<i64: 128, 128>}, {pipeline_mode = #tpu.pipeline_mode<synchronous>, transform_indices = @transform_4, window_bounds = array<i64: 1, 128>}, {pipeline_mode = #tpu.pipeline_mode<synchronous>, transform_indices = @transform_5, window_bounds = array<i64: 128, 4>}, {pipeline_mode = #tpu.pipeline_mode<synchronous>, transform_indices = @transform_6, window_bounds = array<i64: 1, 4>}, {transform_indices = @transform_7, window_bounds = array<i64: 128, 4>}, {transform_indices = @transform_8, window_bounds = array<i64: 1, 8, 128>}]} {
    %c0_i32 = arith.constant 0 : i32
    %0 = arith.cmpi eq, %arg1, %c0_i32 : i32
    %1 = arith.extui %0 : i1 to i32
    %c0_i32_0 = arith.constant 0 : i32
    %2 = arith.cmpi ne, %1, %c0_i32_0 : i32
    scf.if %2 {
      %cst_9 = arith.constant 0.000000e+00 : f32
      %15 = vector.broadcast %cst_9 : f32 to vector<128x128xf32>
      %c0_10 = arith.constant 0 : index
      %c0_11 = arith.constant 0 : index
      %16 = vector.load %arg11[%c0_10, %c0_11] : memref<128x128xf32, #tpu.memory_space<vmem>>, vector<128x128xf32>
      tpu.vector_store %arg11[%c0_10, %c0_11], %15 {strides = array<i32>} : memref<128x128xf32, #tpu.memory_space<vmem>>, vector<128x128xf32>,
      %cst_12 = arith.constant 0.000000e+00 : f32
      %17 = vector.broadcast %cst_12 : f32 to vector<1x8x128xf32>
      %c0_13 = arith.constant 0 : index
      %c0_14 = arith.constant 0 : index
      %c0_15 = arith.constant 0 : index
      %18 = vector.load %arg10[%c0_13, %c0_14, %c0_15] : memref<1x8x128xf32, #tpu.memory_space<vmem>>, vector<1x8x128xf32>
      tpu.vector_store %arg10[%c0_13, %c0_14, %c0_15], %17 {strides = array<i32>} : memref<1x8x128xf32, #tpu.memory_space<vmem>>, vector<1x8x128xf32>,
    } else {
    }
    %c128_i32 = arith.constant 128 : i32
    %3 = arith.muli %arg1, %c128_i32 : i32
    %4 = tpu.assume_multiple %3, 128 : i32
    %5 = arith.index_cast %4 : i32 to index
    %c0 = arith.constant 0 : index
    %6 = vector.load %arg3[%5, %c0] : memref<128x128xbf16, #tpu.memory_space<vmem>>, vector<128x128xbf16>
    %c0_1 = arith.constant 0 : index
    %c0_2 = arith.constant 0 : index
    %7 = vector.load %arg11[%c0_1, %c0_2] : memref<128x128xf32, #tpu.memory_space<vmem>>, vector<128x128xf32>
    %c0_3 = arith.constant 0 : index
    %c0_4 = arith.constant 0 : index
    %8 = vector.load %arg2[%c0_3, %c0_4] : memref<128x128xbf16, #tpu.memory_space<vmem>>, vector<128x128xbf16>
    %cst = arith.constant dense<0.000000e+00> : vector<128x128xf32>
    %9 = tpu.matmul %8, %6, %cst {dimension_numbers = #tpu.dot_dimension_numbers<[1], [0], [0], [1], [0, 0, 1, 1], [], []>} : vector<128x128xbf16>, vector<128x128xbf16>, vector<128x128xf32> -> vector<128x128xf32>
    %10 = arith.addf %7, %9 : vector<128x128xf32>
    %c0_5 = arith.constant 0 : index
    %c0_6 = arith.constant 0 : index
    %11 = vector.load %arg11[%c0_5, %c0_6] : memref<128x128xf32, #tpu.memory_space<vmem>>, vector<128x128xf32>
    tpu.vector_store %arg11[%c0_5, %c0_6], %10 {strides = array<i32>} : memref<128x128xf32, #tpu.memory_space<vmem>>, vector<128x128xf32>,
    %c0_i32_7 = arith.constant 0 : i32
    %12 = arith.cmpi eq, %arg1, %c0_i32_7 : i32
    %13 = arith.extui %12 : i1 to i32
    %c0_i32_8 = arith.constant 0 : i32
    %14 = arith.cmpi ne, %13, %c0_i32_8 : i32
    scf.if %14 {
      %c0_9 = arith.constant 0 : index
      %c0_10 = arith.constant 0 : index
      %15 = vector.load %arg11[%c0_9, %c0_10] : memref<128x128xf32, #tpu.memory_space<vmem>>, vector<128x128xf32>
      %c0_11 = arith.constant 0 : index
      %c0_12 = arith.constant 0 : index
      %16 = vector.load %arg4[%c0_11, %c0_12] : memref<1x128xf32, #tpu.memory_space<vmem>>, vector<1x128xf32>
      %17 = vector.broadcast %16 : vector<1x128xf32> to vector<128x128xf32>
      %18 = arith.addf %15, %17 : vector<128x128xf32>
      %cst_13 = arith.constant 0.000000e+00 : f32
      %19 = vector.broadcast %cst_13 : f32 to vector<128x128xf32>
      %20 = arith.maximumf %18, %19 : vector<128x128xf32>
      %21 = arith.truncf %20 : vector<128x128xf32> to vector<128x128xbf16>
      %c0_14 = arith.constant 0 : index
      %c0_15 = arith.constant 0 : index
      %22 = vector.load %arg5[%c0_14, %c0_15] : memref<128x128xbf16, #tpu.memory_space<vmem>>, vector<128x128xbf16>
      %cst_16 = arith.constant dense<0.000000e+00> : vector<128x128xf32>
      %23 = tpu.matmul %21, %22, %cst_16 {dimension_numbers = #tpu.dot_dimension_numbers<[1], [0], [0], [1], [0, 0, 1, 1], [], []>} : vector<128x128xbf16>, vector<128x128xbf16>, vector<128x128xf32> -> vector<128x128xf32>
      %c0_17 = arith.constant 0 : index
      %c0_18 = arith.constant 0 : index
      %24 = vector.load %arg6[%c0_17, %c0_18] : memref<1x128xf32, #tpu.memory_space<vmem>>, vector<1x128xf32>
      %25 = vector.broadcast %24 : vector<1x128xf32> to vector<128x128xf32>
      %26 = arith.addf %23, %25 : vector<128x128xf32>
      %cst_19 = arith.constant 0.000000e+00 : f32
      %27 = vector.broadcast %cst_19 : f32 to vector<128x128xf32>
      %28 = arith.cmpf ogt, %26, %27 : vector<128x128xf32>
      %cst_20 = arith.constant 0.00999999977 : f32
      %29 = vector.broadcast %cst_20 : f32 to vector<128x128xf32>
      %30 = arith.mulf %29, %26 : vector<128x128xf32>
      %31 = arith.select %28, %26, %30 : vector<128x128xi1>, vector<128x128xf32>
      %32 = arith.truncf %31 : vector<128x128xf32> to vector<128x128xbf16>
      %c0_21 = arith.constant 0 : index
      %c0_22 = arith.constant 0 : index
      %33 = vector.load %arg7[%c0_21, %c0_22] : memref<128x4xbf16, #tpu.memory_space<vmem>>, vector<128x4xbf16>
      %cst_23 = arith.constant dense<0.000000e+00> : vector<128x4xf32>
      %34 = tpu.matmul %32, %33, %cst_23 {dimension_numbers = #tpu.dot_dimension_numbers<[1], [0], [0], [1], [0, 0, 1, 1], [], []>} : vector<128x128xbf16>, vector<128x4xbf16>, vector<128x4xf32> -> vector<128x4xf32>
      %c0_24 = arith.constant 0 : index
      %c0_25 = arith.constant 0 : index
      %35 = vector.load %arg8[%c0_24, %c0_25] : memref<1x4xf32, #tpu.memory_space<vmem>>, vector<1x4xf32>
      %36 = vector.broadcast %35 : vector<1x4xf32> to vector<128x4xf32>
      %37 = arith.addf %34, %36 : vector<128x4xf32>
      %cst_26 = arith.constant dense<0xFF800000> : vector<128xf32>
      %38 = vector.multi_reduction <maximumf>, %37, %cst_26 [1] : vector<128x4xf32> to vector<128xf32>
      %39 = vector.shape_cast %38 : vector<128xf32> to vector<128x1xf32>
      %40 = vector.broadcast %39 : vector<128x1xf32> to vector<128x4xf32>
      %41 = arith.subf %37, %40 : vector<128x4xf32>
      %42 = math.exp %41 : vector<128x4xf32>
      %cst_27 = arith.constant dense<0.000000e+00> : vector<128xf32>
      %43 = vector.multi_reduction <add>, %42, %cst_27 [1] : vector<128x4xf32> to vector<128xf32>
      %44 = vector.shape_cast %43 : vector<128xf32> to vector<128x1xf32>
      %45 = math.log %44 : vector<128x1xf32>
      %46 = arith.addf %39, %45 : vector<128x1xf32>
      %c0_28 = arith.constant 0 : index
      %c0_29 = arith.constant 0 : index
      %47 = vector.load %arg9[%c0_28, %c0_29] : memref<128x4xf32, #tpu.memory_space<vmem>>, vector<128x4xf32>
      %48 = vector.broadcast %46 : vector<128x1xf32> to vector<128x4xf32>
      %49 = arith.subf %48, %37 : vector<128x4xf32>
      %50 = arith.mulf %47, %49 : vector<128x4xf32>
      %51 = vector.shape_cast %50 : vector<128x4xf32> to vector<1x128x4xf32>
      %cst_30 = arith.constant dense<0.000000e+00> : vector<1xf32>
      %52 = vector.multi_reduction <add>, %51, %cst_30 [1, 2] : vector<1x128x4xf32> to vector<1xf32>
      %53 = vector.shape_cast %52 : vector<1xf32> to vector<1x1x1xf32>
      %54 = vector.extract %53[0, 0, 0] : f32 from vector<1x1x1xf32>
      %55 = vector.broadcast %54 : f32 to vector<1x8x128xf32>
      %c0_31 = arith.constant 0 : index
      %c0_32 = arith.constant 0 : index
      %c0_33 = arith.constant 0 : index
      %56 = vector.load %arg10[%c0_31, %c0_32, %c0_33] : memref<1x8x128xf32, #tpu.memory_space<vmem>>, vector<1x8x128xf32>
      tpu.vector_store %arg10[%c0_31, %c0_32, %c0_33], %55 {strides = array<i32>} : memref<1x8x128xf32, #tpu.memory_space<vmem>>, vector<1x8x128xf32>,
    } else {
    }
    return
  }
  func.func @transform_0(%arg0: i32, %arg1: i32) -> (i32, i32) {
    %c0_i32 = arith.constant 0 : i32
    return %arg0, %arg1 : i32, i32
  }
  func.func @transform_1(%arg0: i32, %arg1: i32) -> (i32, i32) {
    %c0_i32 = arith.constant 0 : i32
    %c0_i32_0 = arith.constant 0 : i32
    %c0_i32_1 = arith.constant 0 : i32
    return %c0_i32, %c0_i32_0 : i32, i32
  }
  func.func @transform_2(%arg0: i32, %arg1: i32) -> (i32, i32) {
    %c0_i32 = arith.constant 0 : i32
    %c0_i32_0 = arith.constant 0 : i32
    %c0_i32_1 = arith.constant 0 : i32
    return %c0_i32, %c0_i32_0 : i32, i32
  }
  func.func @transform_3(%arg0: i32, %arg1: i32) -> (i32, i32) {
    %c0_i32 = arith.constant 0 : i32
    %c0_i32_0 = arith.constant 0 : i32
    %c0_i32_1 = arith.constant 0 : i32
    return %c0_i32, %c0_i32_0 : i32, i32
  }
  func.func @transform_4(%arg0: i32, %arg1: i32) -> (i32, i32) {
    %c0_i32 = arith.constant 0 : i32
    %c0_i32_0 = arith.constant 0 : i32
    %c0_i32_1 = arith.constant 0 : i32
    return %c0_i32, %c0_i32_0 : i32, i32
  }
  func.func @transform_5(%arg0: i32, %arg1: i32) -> (i32, i32) {
    %c0_i32 = arith.constant 0 : i32
    %c0_i32_0 = arith.constant 0 : i32
    %c0_i32_1 = arith.constant 0 : i32
    return %c0_i32, %c0_i32_0 : i32, i32
  }
  func.func @transform_6(%arg0: i32, %arg1: i32) -> (i32, i32) {
    %c0_i32 = arith.constant 0 : i32
    %c0_i32_0 = arith.constant 0 : i32
    %c0_i32_1 = arith.constant 0 : i32
    return %c0_i32, %c0_i32_0 : i32, i32
  }
  func.func @transform_7(%arg0: i32, %arg1: i32) -> (i32, i32) {
    %c0_i32 = arith.constant 0 : i32
    %c0_i32_0 = arith.constant 0 : i32
    return %arg0, %c0_i32 : i32, i32
  }
  func.func @transform_8(%arg0: i32, %arg1: i32) -> (i32, i32, i32) {
    %c0_i32 = arith.constant 0 : i32
    %c0_i32_0 = arith.constant 0 : i32
    %c0_i32_1 = arith.constant 0 : i32
    return %arg0, %c0_i32, %c0_i32_0 : i32, i32, i32
  }
}

</mosaic_0001>

<llo_original>
// kernel: supervised_model_loss.3
$region0: #{supervised_model_loss.3}
  #allocation0 [shape = 'u32[]', space=smem, size = 0x4, offset = 0x4, fixed_abs, tag = 'smem constant byte address 0x4 - core index']
  #allocation1 [shape = 'u32[72,128]{1,0:T(1,128)}', space=vmem, size = 0x9000, scoped, tag = 'internal scratch']
  %s0 = inlined_call_operand.vmem [shape: bf16[128,8], index: 0, kind: input, shape index: {}]
  %s1 = inlined_call_operand.vmem [shape: bf16[8,128], index: 1, kind: input, shape index: {}]
  %s2 = inlined_call_operand.vmem [shape: bf16[128,128], index: 2, kind: output, shape index: {}]
  %s3 = sld [smem:[#allocation0]]
  $region18: #{supervised_model_loss.3} parent=0
    _
  %s5 = ssub.s32 1, %s3
  %s6 = scalar_select 0, %s5, %s3
  // Predicated region
  $region2: #{supervised_model_loss.3} parent=0 // pred_check
    _
  $region3: #{supervised_model_loss.3} parent=0 // pred_check_branch
    %8 = sbr.rel (0) target = $region5
  $region4: #{supervised_model_loss.3} parent=0 // pred_region
    _
  $region5: #{supervised_model_loss.3} parent=0 // pred_fallthru
    _
  // Predicated region
  $region6: #{supervised_model_loss.3} parent=0 // pred_check
    _
  $region7: #{supervised_model_loss.3} parent=0 // pred_check_branch
    %10 = sbr.rel (0) target = $region9
  $region8: #{supervised_model_loss.3} parent=0 // pred_region
    _
  $region9: #{supervised_model_loss.3} parent=0 // pred_fallthru
    _
  %v12 = vld [vmem:[%s0] sm:$0xf]
  %v13 = vld [vmem:[%s0 + $0x4] sm:$0xf]
  %v14 = vld [vmem:[%s0 + $0x8] sm:$0xf]
  %v15 = vld [vmem:[%s0 + $0xc] sm:$0xf]
  %v16 = vld [vmem:[%s0 + $0x10] sm:$0xf]
  %v17 = vld [vmem:[%s0 + $0x14] sm:$0xf]
  %v18 = vld [vmem:[%s0 + $0x18] sm:$0xf]
  %v19 = vld [vmem:[%s0 + $0x1c] sm:$0xf]
  %v20 = vld [vmem:[%s0 + $0x20] sm:$0xf]
  %v21 = vld [vmem:[%s0 + $0x24] sm:$0xf]
  %v22 = vld [vmem:[%s0 + $0x28] sm:$0xf]
  %v23 = vld [vmem:[%s0 + $0x2c] sm:$0xf]
  %v24 = vld [vmem:[%s0 + $0x30] sm:$0xf]
  %v25 = vld [vmem:[%s0 + $0x34] sm:$0xf]
  %v26 = vld [vmem:[%s0 + $0x38] sm:$0xf]
  %v27 = vld [vmem:[%s0 + $0x3c] sm:$0xf]
  %v28 = vld [vmem:[%s1] sm:$0xf]
  %v45 = vunpack.c.l.b16 %v12
  %v46 = vunpack.c.l.b16 %v13
  %v47 = vunpack.c.l.b16 %v14
  %v48 = vunpack.c.l.b16 %v15
  %v49 = vunpack.c.l.b16 %v16
  %v50 = vunpack.c.l.b16 %v17
  %v51 = vunpack.c.l.b16 %v18
  %v52 = vunpack.c.l.b16 %v19
  %v53 = vunpack.c.l.b16 %v20
  %v54 = vunpack.c.l.b16 %v21
  %v55 = vunpack.c.l.b16 %v22
  %v56 = vunpack.c.l.b16 %v23
  %v57 = vunpack.c.l.b16 %v24
  %v58 = vunpack.c.l.b16 %v25
  %v59 = vunpack.c.l.b16 %v26
  %v60 = vunpack.c.l.b16 %v27
  %v61 = vpack.c.b16 %v46, %v45
  %v62 = vpack.c.b16 %v48, %v47
  %v63 = vpack.c.b16 %v50, %v49
  %v64 = vpack.c.b16 %v52, %v51
  %v65 = vpack.c.b16 %v54, %v53
  %v66 = vpack.c.b16 %v56, %v55
  %v67 = vpack.c.b16 %v58, %v57
  %v68 = vpack.c.b16 %v60, %v59
  %vm69 = vcmask 64512
  %v71 = vsel %vm69, %v61, 0
  %v74 = vsel %vm69, %v62, 0
  %v77 = vsel %vm69, %v63, 0
  %v80 = vsel %vm69, %v64, 0
  %v83 = vsel %vm69, %v65, 0
  %v86 = vsel %vm69, %v66, 0
  %v89 = vsel %vm69, %v67, 0
  %v92 = vsel %vm69, %v68, 0
  %vm94 = vcmask 1043456
  %v96 = vsel %vm94, %v28, 0
  %98 = vmatpush.bf16.msra.mxu0 0
  %99 = vmatpush.bf16.msra.mxu0 0
  %100 = vmatpush.bf16.msra.mxu0 0
  %101 = vmatpush.bf16.msra.mxu0 0
  %102 = vmatpush.bf16.msra.mxu0 0
  %103 = vmatpush.bf16.msra.mxu0 0
  %104 = vmatpush.bf16.msra.mxu0 0
  %105 = vmatpush.bf16.msra.mxu0 %v96
  %106 = vmatmul.bf16.gmra.mxu0 %v71
  %v107 = vpop.f32.mrf.mxu0
  %v108 = vadd.f32 0.0, %v107
  %v109 = vpop.f32.mrf.mxu0
  %v110 = vadd.f32 0.0, %v109
  %111 = vmatmul.bf16.gmra.mxu0 %v74
  %v112 = vpop.f32.mrf.mxu0
  %v113 = vadd.f32 0.0, %v112
  %v114 = vpop.f32.mrf.mxu0
  %v115 = vadd.f32 0.0, %v114
  %116 = vmatmul.bf16.gmra.mxu0 %v77
  %v117 = vpop.f32.mrf.mxu0
  %v118 = vadd.f32 0.0, %v117
  %v119 = vpop.f32.mrf.mxu0
  %v120 = vadd.f32 0.0, %v119
  %121 = vmatmul.bf16.gmra.mxu0 %v80
  %v122 = vpop.f32.mrf.mxu0
  %v123 = vadd.f32 0.0, %v122
  %v124 = vpop.f32.mrf.mxu0
  %v125 = vadd.f32 0.0, %v124
  %126 = vmatmul.bf16.gmra.mxu0 %v83
  %v127 = vpop.f32.mrf.mxu0
  %v128 = vadd.f32 0.0, %v127
  %v129 = vpop.f32.mrf.mxu0
  %v130 = vadd.f32 0.0, %v129
  %131 = vmatmul.bf16.gmra.mxu0 %v86
  %v132 = vpop.f32.mrf.mxu0
  %v133 = vadd.f32 0.0, %v132
  %v134 = vpop.f32.mrf.mxu0
  %v135 = vadd.f32 0.0, %v134
  %136 = vmatmul.bf16.gmra.mxu0 %v89
  %v137 = vpop.f32.mrf.mxu0
  %v138 = vadd.f32 0.0, %v137
  %v139 = vpop.f32.mrf.mxu0
  %v140 = vadd.f32 0.0, %v139
  %141 = vmatmul.bf16.gmra.mxu0 %v92
  %v142 = vpop.f32.mrf.mxu0
  %v143 = vadd.f32 0.0, %v142
  %v144 = vpop.f32.mrf.mxu0
  %v145 = vadd.f32 0.0, %v144
  %146 = vdwg.mxu0
  %v147 = vpack.c.bf16 %v108, %v108
  %v148 = vpack.c.bf16 %v110, %v110
  %v149 = vpack.c.bf16 %v113, %v113
  %v150 = vpack.c.bf16 %v115, %v115
  %v151 = vpack.c.bf16 %v118, %v118
  %v152 = vpack.c.bf16 %v120, %v120
  %v153 = vpack.c.bf16 %v123, %v123
  %v154 = vpack.c.bf16 %v125, %v125
  %v155 = vpack.c.bf16 %v128, %v128
  %v156 = vpack.c.bf16 %v130, %v130
  %v157 = vpack.c.bf16 %v133, %v133
  %v158 = vpack.c.bf16 %v135, %v135
  %v159 = vpack.c.bf16 %v138, %v138
  %v160 = vpack.c.bf16 %v140, %v140
  %v161 = vpack.c.bf16 %v143, %v143
  %v162 = vpack.c.bf16 %v145, %v145
  %163 = vst [vmem:[%s2] sm:$0xf] %v147
  %164 = vst [vmem:[%s2 + $0x4] sm:$0xf] %v148
  %165 = vst [vmem:[%s2 + $0x8] sm:$0xf] %v149
  %166 = vst [vmem:[%s2 + $0xc] sm:$0xf] %v150
  %167 = vst [vmem:[%s2 + $0x10] sm:$0xf] %v151
  %168 = vst [vmem:[%s2 + $0x14] sm:$0xf] %v152
  %169 = vst [vmem:[%s2 + $0x18] sm:$0xf] %v153
  %170 = vst [vmem:[%s2 + $0x1c] sm:$0xf] %v154
  %171 = vst [vmem:[%s2 + $0x20] sm:$0xf] %v155
  %172 = vst [vmem:[%s2 + $0x24] sm:$0xf] %v156
  %173 = vst [vmem:[%s2 + $0x28] sm:$0xf] %v157
  %174 = vst [vmem:[%s2 + $0x2c] sm:$0xf] %v158
  %175 = vst [vmem:[%s2 + $0x30] sm:$0xf] %v159
  %176 = vst [vmem:[%s2 + $0x34] sm:$0xf] %v160
  %177 = vst [vmem:[%s2 + $0x38] sm:$0xf] %v161
  %178 = vst [vmem:[%s2 + $0x3c] sm:$0xf] %v162
  // Predicated region
  $region10: #{supervised_model_loss.3} parent=0 // pred_check
    _
  $region11: #{supervised_model_loss.3} parent=0 // pred_check_branch
    %180 = sbr.rel (0) target = $region13
  $region12: #{supervised_model_loss.3} parent=0 // pred_region
    _
  $region13: #{supervised_model_loss.3} parent=0 // pred_fallthru
    _
  // Predicated region
  $region14: #{supervised_model_loss.3} parent=0 // pred_check
    _
  $region15: #{supervised_model_loss.3} parent=0 // pred_check_branch
    %182 = sbr.rel (0) target = $region17
  $region16: #{supervised_model_loss.3} parent=0 // pred_region
    _
  $region17: #{supervised_model_loss.3} parent=0 // pred_fallthru
    _

// kernel: supervised_model_loss.4
$region0: #{supervised_model_loss.4}
  #allocation0 [shape = 'u32[]', space=smem, size = 0x4, offset = 0x4, fixed_abs, tag = 'smem constant byte address 0x4 - core index']
  #allocation1 [shape = 'u32[72,128]{1,0:T(1,128)}', space=vmem, size = 0x9000, scoped, tag = 'internal scratch']
  #allocation2 [shape = 'f32[128,128]{1,0:T(8,128)}', space=vmem, size = 0x10000, scoped, tag = 'scratch operand']
  %s0 = inlined_call_operand.vmem [shape: bf16[128,128], index: 0, kind: input, shape index: {}]
  %s1 = inlined_call_operand.vmem [shape: bf16[128,128], index: 1, kind: input, shape index: {}]
  %s2 = inlined_call_operand.vmem [shape: f32[1,128], index: 2, kind: input, shape index: {}]
  %s3 = inlined_call_operand.vmem [shape: bf16[128,128], index: 3, kind: input, shape index: {}]
  %s4 = inlined_call_operand.vmem [shape: bf16[128,128], index: 4, kind: output, shape index: {}]
  %s5 = sld [smem:[#allocation0]]
  $region34: #{supervised_model_loss.4} parent=0
    _
  %s7 = ssub.s32 1, %s5
  %s8 = scalar_select 0, %s7, %s5
  // Predicated region
  $region2: #{supervised_model_loss.4} parent=0 // pred_check
    _
  $region3: #{supervised_model_loss.4} parent=0 // pred_check_branch
    %10 = sbr.rel (0) target = $region5
  $region4: #{supervised_model_loss.4} parent=0 // pred_region
    _
  $region5: #{supervised_model_loss.4} parent=0 // pred_fallthru
    _
  // Predicated region
  $region6: #{supervised_model_loss.4} parent=0 // pred_check
    _
  $region7: #{supervised_model_loss.4} parent=0 // pred_check_branch
    %12 = sbr.rel (0) target = $region9
  $region8: #{supervised_model_loss.4} parent=0 // pred_region
    _
  $region9: #{supervised_model_loss.4} parent=0 // pred_fallthru
    _
  // Predicated region
  $region10: #{supervised_model_loss.4} parent=0 // pred_check
    _
  $region11: #{supervised_model_loss.4} parent=0 // pred_check_branch
    %14 = sbr.rel (0) target = $region13
  $region12: #{supervised_model_loss.4} parent=0 // pred_region
    _
  $region13: #{supervised_model_loss.4} parent=0 // pred_fallthru
    _
  // Predicated region
  $region14: #{supervised_model_loss.4} parent=0 // pred_check
    _
  $region15: #{supervised_model_loss.4} parent=0 // pred_check_branch
    %16 = sbr.rel (0) target = $region17
  $region16: #{supervised_model_loss.4} parent=0 // pred_region
    _
  $region17: #{supervised_model_loss.4} parent=0 // pred_fallthru
    _
  %p17 = scmp.eq.s32.totalorder 0, 0
  // Predicated region
  $region18: #{supervised_model_loss.4} parent=0 // pred_check
    %p18 = pneg %p17
  $region19: #{supervised_model_loss.4} parent=0 // pred_check_branch
    %20 = sbr.rel (%p18) target = $region21
  $region20: #{supervised_model_loss.4} parent=0 // pred_region
    %21 = vst [vmem:[#allocation2] sm:$0xff] 0.0
    %22 = vst [vmem:[#allocation2 + $0x8] sm:$0xff] 0.0
    %23 = vst [vmem:[#allocation2 + $0x10] sm:$0xff] 0.0
    %24 = vst [vmem:[#allocation2 + $0x18] sm:$0xff] 0.0
    %25 = vst [vmem:[#allocation2 + $0x20] sm:$0xff] 0.0
    %26 = vst [vmem:[#allocation2 + $0x28] sm:$0xff] 0.0
    %27 = vst [vmem:[#allocation2 + $0x30] sm:$0xff] 0.0
    %28 = vst [vmem:[#allocation2 + $0x38] sm:$0xff] 0.0
    %29 = vst [vmem:[#allocation2 + $0x40] sm:$0xff] 0.0
    %30 = vst [vmem:[#allocation2 + $0x48] sm:$0xff] 0.0
    %31 = vst [vmem:[#allocation2 + $0x50] sm:$0xff] 0.0
    %32 = vst [vmem:[#allocation2 + $0x58] sm:$0xff] 0.0
    %33 = vst [vmem:[#allocation2 + $0x60] sm:$0xff] 0.0
    %34 = vst [vmem:[#allocation2 + $0x68] sm:$0xff] 0.0
    %35 = vst [vmem:[#allocation2 + $0x70] sm:$0xff] 0.0
    %36 = vst [vmem:[#allocation2 + $0x78] sm:$0xff] 0.0
  $region21: #{supervised_model_loss.4} parent=0 // pred_fallthru
    _
  %s37 = smul.u32 0, 128
  %s38 = sshra.s32 %s37, 3
  %s39 = sand.u32 %s37, 7
  %s40 = smul.addr %s38, 4
  %s41 = scalar_lea.vmem %s1, %s40
  %v42 = vld [vmem:[%s41] sm:$0xf]
  %v43 = vld [vmem:[%s41 + $0x4] sm:$0xf]
  %v44 = vld [vmem:[%s41 + $0x8] sm:$0xf]
  %v45 = vld [vmem:[%s41 + $0xc] sm:$0xf]
  %v46 = vld [vmem:[%s41 + $0x10] sm:$0xf]
  %v47 = vld [vmem:[%s41 + $0x14] sm:$0xf]
  %v48 = vld [vmem:[%s41 + $0x18] sm:$0xf]
  %v49 = vld [vmem:[%s41 + $0x1c] sm:$0xf]
  %v50 = vld [vmem:[%s41 + $0x20] sm:$0xf]
  %v51 = vld [vmem:[%s41 + $0x24] sm:$0xf]
  %v52 = vld [vmem:[%s41 + $0x28] sm:$0xf]
  %v53 = vld [vmem:[%s41 + $0x2c] sm:$0xf]
  %v54 = vld [vmem:[%s41 + $0x30] sm:$0xf]
  %v55 = vld [vmem:[%s41 + $0x34] sm:$0xf]
  %v56 = vld [vmem:[%s41 + $0x38] sm:$0xf]
  %v57 = vld [vmem:[%s41 + $0x3c] sm:$0xf]
  %v58 = vld [vmem:[#allocation2] sm:$0xff]
  %v59 = vld [vmem:[#allocation2 + $0x8] sm:$0xff]
  %v60 = vld [vmem:[#allocation2 + $0x10] sm:$0xff]
  %v61 = vld [vmem:[#allocation2 + $0x18] sm:$0xff]
  %v62 = vld [vmem:[#allocation2 + $0x20] sm:$0xff]
  %v63 = vld [vmem:[#allocation2 + $0x28] sm:$0xff]
  %v64 = vld [vmem:[#allocation2 + $0x30] sm:$0xff]
  %v65 = vld [vmem:[#allocation2 + $0x38] sm:$0xff]
  %v66 = vld [vmem:[#allocation2 + $0x40] sm:$0xff]
  %v67 = vld [vmem:[#allocation2 + $0x48] sm:$0xff]
  %v68 = vld [vmem:[#allocation2 + $0x50] sm:$0xff]
  %v69 = vld [vmem:[#allocation2 + $0x58] sm:$0xff]
  %v70 = vld [vmem:[#allocation2 + $0x60] sm:$0xff]
  %v71 = vld [vmem:[#allocation2 + $0x68] sm:$0xff]
  %v72 = vld [vmem:[#allocation2 + $0x70] sm:$0xff]
  %v73 = vld [vmem:[#allocation2 + $0x78] sm:$0xff]
  %v74 = vld [vmem:[%s0] sm:$0xf]
  %v75 = vld [vmem:[%s0 + $0x4] sm:$0xf]
  %v76 = vld [vmem:[%s0 + $0x8] sm:$0xf]
  %v77 = vld [vmem:[%s0 + $0xc] sm:$0xf]
  %v78 = vld [vmem:[%s0 + $0x10] sm:$0xf]
  %v79 = vld [vmem:[%s0 + $0x14] sm:$0xf]
  %v80 = vld [vmem:[%s0 + $0x18] sm:$0xf]
  %v81 = vld [vmem:[%s0 + $0x1c] sm:$0xf]
  %v82 = vld [vmem:[%s0 + $0x20] sm:$0xf]
  %v83 = vld [vmem:[%s0 + $0x24] sm:$0xf]
  %v84 = vld [vmem:[%s0 + $0x28] sm:$0xf]
  %v85 = vld [vmem:[%s0 + $0x2c] sm:$0xf]
  %v86 = vld [vmem:[%s0 + $0x30] sm:$0xf]
  %v87 = vld [vmem:[%s0 + $0x34] sm:$0xf]
  %v88 = vld [vmem:[%s0 + $0x38] sm:$0xf]
  %v89 = vld [vmem:[%s0 + $0x3c] sm:$0xf]
  %v106 = vunpack.c.l.b16 %v74
  %v107 = vunpack.c.l.b16 %v75
  %v108 = vunpack.c.l.b16 %v76
  %v109 = vunpack.c.l.b16 %v77
  %v110 = vunpack.c.l.b16 %v78
  %v111 = vunpack.c.l.b16 %v79
  %v112 = vunpack.c.l.b16 %v80
  %v113 = vunpack.c.l.b16 %v81
  %v114 = vunpack.c.l.b16 %v82
  %v115 = vunpack.c.l.b16 %v83
  %v116 = vunpack.c.l.b16 %v84
  %v117 = vunpack.c.l.b16 %v85
  %v118 = vunpack.c.l.b16 %v86
  %v119 = vunpack.c.l.b16 %v87
  %v120 = vunpack.c.l.b16 %v88
  %v121 = vunpack.c.l.b16 %v89
  %v122 = vpack.c.b16 %v107, %v106
  %v123 = vpack.c.b16 %v109, %v108
  %v124 = vpack.c.b16 %v111, %v110
  %v125 = vpack.c.b16 %v113, %v112
  %v126 = vpack.c.b16 %v115, %v114
  %v127 = vpack.c.b16 %v117, %v116
  %v128 = vpack.c.b16 %v119, %v118
  %v129 = vpack.c.b16 %v121, %v120
  %v154 = vunpack.c.l.b16 %v42
  %v155 = vunpack.c.l.b16 %v43
  %v156 = vunpack.c.l.b16 %v44
  %v157 = vunpack.c.l.b16 %v45
  %v158 = vunpack.c.l.b16 %v46
  %v159 = vunpack.c.l.b16 %v47
  %v160 = vunpack.c.l.b16 %v48
  %v161 = vunpack.c.l.b16 %v49
  %v162 = vunpack.c.l.b16 %v50
  %v163 = vunpack.c.l.b16 %v51
  %v164 = vunpack.c.l.b16 %v52
  %v165 = vunpack.c.l.b16 %v53
  %v166 = vunpack.c.l.b16 %v54
  %v167 = vunpack.c.l.b16 %v55
  %v168 = vunpack.c.l.b16 %v56
  %v169 = vunpack.c.l.b16 %v57
  %v170 = vpack.c.b16 %v155, %v154
  %v171 = vpack.c.b16 %v157, %v156
  %v172 = vpack.c.b16 %v159, %v158
  %v173 = vpack.c.b16 %v161, %v160
  %v174 = vpack.c.b16 %v163, %v162
  %v175 = vpack.c.b16 %v165, %v164
  %v176 = vpack.c.b16 %v167, %v166
  %v177 = vpack.c.b16 %v169, %v168
  %186 = vmatpush.bf16.msra.mxu0 %v177
  %187 = vmatpush.bf16.msra.mxu0 %v176
  %188 = vmatpush.bf16.msra.mxu0 %v175
  %189 = vmatpush.bf16.msra.mxu0 %v174
  %190 = vmatpush.bf16.msra.mxu0 %v173
  %191 = vmatpush.bf16.msra.mxu0 %v172
  %192 = vmatpush.bf16.msra.mxu0 %v171
  %193 = vmatpush.bf16.msra.mxu0 %v170
  %194 = vmatmul.bf16.gmra.mxu0 %v122
  %v195 = vpop.f32.mrf.mxu0
  %v196 = vadd.f32 0.0, %v195
  %v197 = vpop.f32.mrf.mxu0
  %v198 = vadd.f32 0.0, %v197
  %199 = vmatmul.bf16.gmra.mxu0 %v123
  %v200 = vpop.f32.mrf.mxu0
  %v201 = vadd.f32 0.0, %v200
  %v202 = vpop.f32.mrf.mxu0
  %v203 = vadd.f32 0.0, %v202
  %204 = vmatmul.bf16.gmra.mxu0 %v124
  %v205 = vpop.f32.mrf.mxu0
  %v206 = vadd.f32 0.0, %v205
  %v207 = vpop.f32.mrf.mxu0
  %v208 = vadd.f32 0.0, %v207
  %209 = vmatmul.bf16.gmra.mxu0 %v125
  %v210 = vpop.f32.mrf.mxu0
  %v211 = vadd.f32 0.0, %v210
  %v212 = vpop.f32.mrf.mxu0
  %v213 = vadd.f32 0.0, %v212
  %214 = vmatmul.bf16.gmra.mxu0 %v126
  %v215 = vpop.f32.mrf.mxu0
  %v216 = vadd.f32 0.0, %v215
  %v217 = vpop.f32.mrf.mxu0
  %v218 = vadd.f32 0.0, %v217
  %219 = vmatmul.bf16.gmra.mxu0 %v127
  %v220 = vpop.f32.mrf.mxu0
  %v221 = vadd.f32 0.0, %v220
  %v222 = vpop.f32.mrf.mxu0
  %v223 = vadd.f32 0.0, %v222
  %224 = vmatmul.bf16.gmra.mxu0 %v128
  %v225 = vpop.f32.mrf.mxu0
  %v226 = vadd.f32 0.0, %v225
  %v227 = vpop.f32.mrf.mxu0
  %v228 = vadd.f32 0.0, %v227
  %229 = vmatmul.bf16.gmra.mxu0 %v129
  %v230 = vpop.f32.mrf.mxu0
  %v231 = vadd.f32 0.0, %v230
  %v232 = vpop.f32.mrf.mxu0
  %v233 = vadd.f32 0.0, %v232
  %234 = vdwg.mxu0
  %v235 = vadd.f32 %v58, %v196
  %v236 = vadd.f32 %v59, %v198
  %v237 = vadd.f32 %v60, %v201
  %v238 = vadd.f32 %v61, %v203
  %v239 = vadd.f32 %v62, %v206
  %v240 = vadd.f32 %v63, %v208
  %v241 = vadd.f32 %v64, %v211
  %v242 = vadd.f32 %v65, %v213
  %v243 = vadd.f32 %v66, %v216
  %v244 = vadd.f32 %v67, %v218
  %v245 = vadd.f32 %v68, %v221
  %v246 = vadd.f32 %v69, %v223
  %v247 = vadd.f32 %v70, %v226
  %v248 = vadd.f32 %v71, %v228
  %v249 = vadd.f32 %v72, %v231
  %v250 = vadd.f32 %v73, %v233
  %251 = vst [vmem:[#allocation2] sm:$0xff] %v235
  %252 = vst [vmem:[#allocation2 + $0x8] sm:$0xff] %v236
  %253 = vst [vmem:[#allocation2 + $0x10] sm:$0xff] %v237
  %254 = vst [vmem:[#allocation2 + $0x18] sm:$0xff] %v238
  %255 = vst [vmem:[#allocation2 + $0x20] sm:$0xff] %v239
  %256 = vst [vmem:[#allocation2 + $0x28] sm:$0xff] %v240
  %257 = vst [vmem:[#allocation2 + $0x30] sm:$0xff] %v241
  %258 = vst [vmem:[#allocation2 + $0x38] sm:$0xff] %v242
  %259 = vst [vmem:[#allocation2 + $0x40] sm:$0xff] %v243
  %260 = vst [vmem:[#allocation2 + $0x48] sm:$0xff] %v244
  %261 = vst [vmem:[#allocation2 + $0x50] sm:$0xff] %v245
  %262 = vst [vmem:[#allocation2 + $0x58] sm:$0xff] %v246
  %263 = vst [vmem:[#allocation2 + $0x60] sm:$0xff] %v247
  %264 = vst [vmem:[#allocation2 + $0x68] sm:$0xff] %v248
  %265 = vst [vmem:[#allocation2 + $0x70] sm:$0xff] %v249
  %266 = vst [vmem:[#allocation2 + $0x78] sm:$0xff] %v250
  // Predicated region
  $region22: #{supervised_model_loss.4} parent=0 // pred_check
    %p267 = pneg %p17
  $region23: #{supervised_model_loss.4} parent=0 // pred_check_branch
    %269 = sbr.rel (%p267) target = $region25
  $region24: #{supervised_model_loss.4} parent=0 // pred_region
    %v270 = vld [vmem:[#allocation2] sm:$0xff]
    %v271 = vld [vmem:[#allocation2 + $0x8] sm:$0xff]
    %v272 = vld [vmem:[#allocation2 + $0x10] sm:$0xff]
    %v273 = vld [vmem:[#allocation2 + $0x18] sm:$0xff]
    %v274 = vld [vmem:[#allocation2 + $0x20] sm:$0xff]
    %v275 = vld [vmem:[#allocation2 + $0x28] sm:$0xff]
    %v276 = vld [vmem:[#allocation2 + $0x30] sm:$0xff]
    %v277 = vld [vmem:[#allocation2 + $0x38] sm:$0xff]
    %v278 = vld [vmem:[#allocation2 + $0x40] sm:$0xff]
    %v279 = vld [vmem:[#allocation2 + $0x48] sm:$0xff]
    %v280 = vld [vmem:[#allocation2 + $0x50] sm:$0xff]
    %v281 = vld [vmem:[#allocation2 + $0x58] sm:$0xff]
    %v282 = vld [vmem:[#allocation2 + $0x60] sm:$0xff]
    %v283 = vld [vmem:[#allocation2 + $0x68] sm:$0xff]
    %v284 = vld [vmem:[#allocation2 + $0x70] sm:$0xff]
    %v285 = vld [vmem:[#allocation2 + $0x78] sm:$0xff]
    %v286 = vld [vmem:[%s2] sm:$0x1]
    %v288 = vperm.slane %v286, 0
    %v290 = vadd.f32 %v270, %v288
    %v291 = vadd.f32 %v271, %v288
    %v292 = vadd.f32 %v272, %v288
    %v293 = vadd.f32 %v273, %v288
    %v294 = vadd.f32 %v274, %v288
    %v295 = vadd.f32 %v275, %v288
    %v296 = vadd.f32 %v276, %v288
    %v297 = vadd.f32 %v277, %v288
    %v298 = vadd.f32 %v278, %v288
    %v299 = vadd.f32 %v279, %v288
    %v300 = vadd.f32 %v280, %v288
    %v301 = vadd.f32 %v281, %v288
    %v302 = vadd.f32 %v282, %v288
    %v303 = vadd.f32 %v283, %v288
    %v304 = vadd.f32 %v284, %v288
    %v305 = vadd.f32 %v285, %v288
    %v306 = vmax.f32 %v290, 0.0
    %v307 = vmax.f32 %v291, 0.0
    %v308 = vmax.f32 %v292, 0.0
    %v309 = vmax.f32 %v293, 0.0
    %v310 = vmax.f32 %v294, 0.0
    %v311 = vmax.f32 %v295, 0.0
    %v312 = vmax.f32 %v296, 0.0
    %v313 = vmax.f32 %v297, 0.0
    %v314 = vmax.f32 %v298, 0.0
    %v315 = vmax.f32 %v299, 0.0
    %v316 = vmax.f32 %v300, 0.0
    %v317 = vmax.f32 %v301, 0.0
    %v318 = vmax.f32 %v302, 0.0
    %v319 = vmax.f32 %v303, 0.0
    %v320 = vmax.f32 %v304, 0.0
    %v321 = vmax.f32 %v305, 0.0
    %v322 = vpack.c.bf16 %v307, %v306
    %v323 = vpack.c.bf16 %v309, %v308
    %v324 = vpack.c.bf16 %v311, %v310
    %v325 = vpack.c.bf16 %v313, %v312
    %v326 = vpack.c.bf16 %v315, %v314
    %v327 = vpack.c.bf16 %v317, %v316
    %v328 = vpack.c.bf16 %v319, %v318
    %v329 = vpack.c.bf16 %v321, %v320
    %v330 = vld [vmem:[%s3] sm:$0xf]
    %v331 = vld [vmem:[%s3 + $0x4] sm:$0xf]
    %v332 = vld [vmem:[%s3 + $0x8] sm:$0xf]
    %v333 = vld [vmem:[%s3 + $0xc] sm:$0xf]
    %v334 = vld [vmem:[%s3 + $0x10] sm:$0xf]
    %v335 = vld [vmem:[%s3 + $0x14] sm:$0xf]
    %v336 = vld [vmem:[%s3 + $0x18] sm:$0xf]
    %v337 = vld [vmem:[%s3 + $0x1c] sm:$0xf]
    %v338 = vld [vmem:[%s3 + $0x20] sm:$0xf]
    %v339 = vld [vmem:[%s3 + $0x24] sm:$0xf]
    %v340 = vld [vmem:[%s3 + $0x28] sm:$0xf]
    %v341 = vld [vmem:[%s3 + $0x2c] sm:$0xf]
    %v342 = vld [vmem:[%s3 + $0x30] sm:$0xf]
    %v343 = vld [vmem:[%s3 + $0x34] sm:$0xf]
    %v344 = vld [vmem:[%s3 + $0x38] sm:$0xf]
    %v345 = vld [vmem:[%s3 + $0x3c] sm:$0xf]
    %v362 = vunpack.c.l.b16 %v330
    %v363 = vunpack.c.l.b16 %v331
    %v364 = vunpack.c.l.b16 %v332
    %v365 = vunpack.c.l.b16 %v333
    %v366 = vunpack.c.l.b16 %v334
    %v367 = vunpack.c.l.b16 %v335
    %v368 = vunpack.c.l.b16 %v336
    %v369 = vunpack.c.l.b16 %v337
    %v370 = vunpack.c.l.b16 %v338
    %v371 = vunpack.c.l.b16 %v339
    %v372 = vunpack.c.l.b16 %v340
    %v373 = vunpack.c.l.b16 %v341
    %v374 = vunpack.c.l.b16 %v342
    %v375 = vunpack.c.l.b16 %v343
    %v376 = vunpack.c.l.b16 %v344
    %v377 = vunpack.c.l.b16 %v345
    %v378 = vpack.c.b16 %v363, %v362
    %v379 = vpack.c.b16 %v365, %v364
    %v380 = vpack.c.b16 %v367, %v366
    %v381 = vpack.c.b16 %v369, %v368
    %v382 = vpack.c.b16 %v371, %v370
    %v383 = vpack.c.b16 %v373, %v372
    %v384 = vpack.c.b16 %v375, %v374
    %v385 = vpack.c.b16 %v377, %v376
    %394 = vmatpush.bf16.msra.mxu0 %v385
    %395 = vmatpush.bf16.msra.mxu0 %v384
    %396 = vmatpush.bf16.msra.mxu0 %v383
    %397 = vmatpush.bf16.msra.mxu0 %v382
    %398 = vmatpush.bf16.msra.mxu0 %v381
    %399 = vmatpush.bf16.msra.mxu0 %v380
    %400 = vmatpush.bf16.msra.mxu0 %v379
    %401 = vmatpush.bf16.msra.mxu0 %v378
    %402 = vmatmul.bf16.gmra.mxu0 %v322
    %v403 = vpop.f32.mrf.mxu0
    %v404 = vadd.f32 0.0, %v403
    %v405 = vpop.f32.mrf.mxu0
    %v406 = vadd.f32 0.0, %v405
    %407 = vmatmul.bf16.gmra.mxu0 %v323
    %v408 = vpop.f32.mrf.mxu0
    %v409 = vadd.f32 0.0, %v408
    %v410 = vpop.f32.mrf.mxu0
    %v411 = vadd.f32 0.0, %v410
    %412 = vmatmul.bf16.gmra.mxu0 %v324
    %v413 = vpop.f32.mrf.mxu0
    %v414 = vadd.f32 0.0, %v413
    %v415 = vpop.f32.mrf.mxu0
    %v416 = vadd.f32 0.0, %v415
    %417 = vmatmul.bf16.gmra.mxu0 %v325
    %v418 = vpop.f32.mrf.mxu0
    %v419 = vadd.f32 0.0, %v418
    %v420 = vpop.f32.mrf.mxu0
    %v421 = vadd.f32 0.0, %v420
    %422 = vmatmul.bf16.gmra.mxu0 %v326
    %v423 = vpop.f32.mrf.mxu0
    %v424 = vadd.f32 0.0, %v423
    %v425 = vpop.f32.mrf.mxu0
    %v426 = vadd.f32 0.0, %v425
    %427 = vmatmul.bf16.gmra.mxu0 %v327
    %v428 = vpop.f32.mrf.mxu0
    %v429 = vadd.f32 0.0, %v428
    %v430 = vpop.f32.mrf.mxu0
    %v431 = vadd.f32 0.0, %v430
    %432 = vmatmul.bf16.gmra.mxu0 %v328
    %v433 = vpop.f32.mrf.mxu0
    %v434 = vadd.f32 0.0, %v433
    %v435 = vpop.f32.mrf.mxu0
    %v436 = vadd.f32 0.0, %v435
    %437 = vmatmul.bf16.gmra.mxu0 %v329
    %v438 = vpop.f32.mrf.mxu0
    %v439 = vadd.f32 0.0, %v438
    %v440 = vpop.f32.mrf.mxu0
    %v441 = vadd.f32 0.0, %v440
    %442 = vdwg.mxu0
    %v443 = vpack.c.bf16 %v404, %v404
    %v444 = vpack.c.bf16 %v406, %v406
    %v445 = vpack.c.bf16 %v409, %v409
    %v446 = vpack.c.bf16 %v411, %v411
    %v447 = vpack.c.bf16 %v414, %v414
    %v448 = vpack.c.bf16 %v416, %v416
    %v449 = vpack.c.bf16 %v419, %v419
    %v450 = vpack.c.bf16 %v421, %v421
    %v451 = vpack.c.bf16 %v424, %v424
    %v452 = vpack.c.bf16 %v426, %v426
    %v453 = vpack.c.bf16 %v429, %v429
    %v454 = vpack.c.bf16 %v431, %v431
    %v455 = vpack.c.bf16 %v434, %v434
    %v456 = vpack.c.bf16 %v436, %v436
    %v457 = vpack.c.bf16 %v439, %v439
    %v458 = vpack.c.bf16 %v441, %v441
    %459 = vst [vmem:[%s4] sm:$0xf] %v443
    %460 = vst [vmem:[%s4 + $0x4] sm:$0xf] %v444
    %461 = vst [vmem:[%s4 + $0x8] sm:$0xf] %v445
    %462 = vst [vmem:[%s4 + $0xc] sm:$0xf] %v446
    %463 = vst [vmem:[%s4 + $0x10] sm:$0xf] %v447
    %464 = vst [vmem:[%s4 + $0x14] sm:$0xf] %v448
    %465 = vst [vmem:[%s4 + $0x18] sm:$0xf] %v449
    %466 = vst [vmem:[%s4 + $0x1c] sm:$0xf] %v450
    %467 = vst [vmem:[%s4 + $0x20] sm:$0xf] %v451
    %468 = vst [vmem:[%s4 + $0x24] sm:$0xf] %v452
    %469 = vst [vmem:[%s4 + $0x28] sm:$0xf] %v453
    %470 = vst [vmem:[%s4 + $0x2c] sm:$0xf] %v454
    %471 = vst [vmem:[%s4 + $0x30] sm:$0xf] %v455
    %472 = vst [vmem:[%s4 + $0x34] sm:$0xf] %v456
    %473 = vst [vmem:[%s4 + $0x38] sm:$0xf] %v457
    %474 = vst [vmem:[%s4 + $0x3c] sm:$0xf] %v458
  $region25: #{supervised_model_loss.4} parent=0 // pred_fallthru
    _
  // Predicated region
  $region26: #{supervised_model_loss.4} parent=0 // pred_check
    _
  $region27: #{supervised_model_loss.4} parent=0 // pred_check_branch
    %476 = sbr.rel (0) target = $region29
  $region28: #{supervised_model_loss.4} parent=0 // pred_region
    _
  $region29: #{supervised_model_loss.4} parent=0 // pred_fallthru
    _
  // Predicated region
  $region30: #{supervised_model_loss.4} parent=0 // pred_check
    _
  $region31: #{supervised_model_loss.4} parent=0 // pred_check_branch
    %478 = sbr.rel (0) target = $region33
  $region32: #{supervised_model_loss.4} parent=0 // pred_region
    _
  $region33: #{supervised_model_loss.4} parent=0 // pred_fallthru
    _

// kernel: supervised_model_loss.5
$region0: #{supervised_model_loss.5}
  #allocation0 [shape = 'u32[]', space=smem, size = 0x4, offset = 0x4, fixed_abs, tag = 'smem constant byte address 0x4 - core index']
  #allocation1 [shape = 'u32[72,128]{1,0:T(1,128)}', space=vmem, size = 0x9000, scoped, tag = 'internal scratch']
  #allocation2 [shape = 'f32[128,128]{1,0:T(8,128)}', space=vmem, size = 0x10000, scoped, tag = 'scratch operand']
  %s0 = inlined_call_operand.vmem [shape: bf16[128,128], index: 0, kind: input, shape index: {}]
  %s1 = inlined_call_operand.vmem [shape: bf16[128,128], index: 1, kind: input, shape index: {}]
  %s2 = inlined_call_operand.vmem [shape: f32[1,128], index: 2, kind: input, shape index: {}]
  %s3 = inlined_call_operand.vmem [shape: bf16[128,128], index: 3, kind: input, shape index: {}]
  %s4 = inlined_call_operand.vmem [shape: f32[1,128], index: 4, kind: input, shape index: {}]
  %s5 = inlined_call_operand.vmem [shape: bf16[128,4], index: 5, kind: input, shape index: {}]
  %s6 = inlined_call_operand.vmem [shape: f32[1,4], index: 6, kind: input, shape index: {}]
  %s7 = inlined_call_operand.vmem [shape: f32[128,4], index: 7, kind: input, shape index: {}]
  %s8 = inlined_call_operand.vmem [shape: f32[1,8,128], index: 8, kind: output, shape index: {}]
  %s9 = sld [smem:[#allocation0]]
  $region50: #{supervised_model_loss.5} parent=0
    _
  %s11 = ssub.s32 1, %s9
  %s12 = scalar_select 0, %s11, %s9
  // Predicated region
  $region2: #{supervised_model_loss.5} parent=0 // pred_check
    _
  $region3: #{supervised_model_loss.5} parent=0 // pred_check_branch
    %14 = sbr.rel (0) target = $region5
  $region4: #{supervised_model_loss.5} parent=0 // pred_region
    _
  $region5: #{supervised_model_loss.5} parent=0 // pred_fallthru
    _
  // Predicated region
  $region6: #{supervised_model_loss.5} parent=0 // pred_check
    _
  $region7: #{supervised_model_loss.5} parent=0 // pred_check_branch
    %16 = sbr.rel (0) target = $region9
  $region8: #{supervised_model_loss.5} parent=0 // pred_region
    _
  $region9: #{supervised_model_loss.5} parent=0 // pred_fallthru
    _
  // Predicated region
  $region10: #{supervised_model_loss.5} parent=0 // pred_check
    _
  $region11: #{supervised_model_loss.5} parent=0 // pred_check_branch
    %18 = sbr.rel (0) target = $region13
  $region12: #{supervised_model_loss.5} parent=0 // pred_region
    _
  $region13: #{supervised_model_loss.5} parent=0 // pred_fallthru
    _
  // Predicated region
  $region14: #{supervised_model_loss.5} parent=0 // pred_check
    _
  $region15: #{supervised_model_loss.5} parent=0 // pred_check_branch
    %20 = sbr.rel (0) target = $region17
  $region16: #{supervised_model_loss.5} parent=0 // pred_region
    _
  $region17: #{supervised_model_loss.5} parent=0 // pred_fallthru
    _
  // Predicated region
  $region18: #{supervised_model_loss.5} parent=0 // pred_check
    _
  $region19: #{supervised_model_loss.5} parent=0 // pred_check_branch
    %22 = sbr.rel (0) target = $region21
  $region20: #{supervised_model_loss.5} parent=0 // pred_region
    _
  $region21: #{supervised_model_loss.5} parent=0 // pred_fallthru
    _
  // Predicated region
  $region22: #{supervised_model_loss.5} parent=0 // pred_check
    _
  $region23: #{supervised_model_loss.5} parent=0 // pred_check_branch
    %24 = sbr.rel (0) target = $region25
  $region24: #{supervised_model_loss.5} parent=0 // pred_region
    _
  $region25: #{supervised_model_loss.5} parent=0 // pred_fallthru
    _
  // Predicated region
  $region26: #{supervised_model_loss.5} parent=0 // pred_check
    _
  $region27: #{supervised_model_loss.5} parent=0 // pred_check_branch
    %26 = sbr.rel (0) target = $region29
  $region28: #{supervised_model_loss.5} parent=0 // pred_region
    _
  $region29: #{supervised_model_loss.5} parent=0 // pred_fallthru
    _
  // Predicated region
  $region30: #{supervised_model_loss.5} parent=0 // pred_check
    _
  $region31: #{supervised_model_loss.5} parent=0 // pred_check_branch
    %28 = sbr.rel (0) target = $region33
  $region32: #{supervised_model_loss.5} parent=0 // pred_region
    _
  $region33: #{supervised_model_loss.5} parent=0 // pred_fallthru
    _
  %p29 = scmp.eq.s32.totalorder 0, 0
  // Predicated region
  $region34: #{supervised_model_loss.5} parent=0 // pred_check
    %p30 = pneg %p29
  $region35: #{supervised_model_loss.5} parent=0 // pred_check_branch
    %32 = sbr.rel (%p30) target = $region37
  $region36: #{supervised_model_loss.5} parent=0 // pred_region
    %33 = vst [vmem:[#allocation2] sm:$0xff] 0.0
    %34 = vst [vmem:[#allocation2 + $0x8] sm:$0xff] 0.0
    %35 = vst [vmem:[#allocation2 + $0x10] sm:$0xff] 0.0
    %36 = vst [vmem:[#allocation2 + $0x18] sm:$0xff] 0.0
    %37 = vst [vmem:[#allocation2 + $0x20] sm:$0xff] 0.0
    %38 = vst [vmem:[#allocation2 + $0x28] sm:$0xff] 0.0
    %39 = vst [vmem:[#allocation2 + $0x30] sm:$0xff] 0.0
    %40 = vst [vmem:[#allocation2 + $0x38] sm:$0xff] 0.0
    %41 = vst [vmem:[#allocation2 + $0x40] sm:$0xff] 0.0
    %42 = vst [vmem:[#allocation2 + $0x48] sm:$0xff] 0.0
    %43 = vst [vmem:[#allocation2 + $0x50] sm:$0xff] 0.0
    %44 = vst [vmem:[#allocation2 + $0x58] sm:$0xff] 0.0
    %45 = vst [vmem:[#allocation2 + $0x60] sm:$0xff] 0.0
    %46 = vst [vmem:[#allocation2 + $0x68] sm:$0xff] 0.0
    %47 = vst [vmem:[#allocation2 + $0x70] sm:$0xff] 0.0
    %48 = vst [vmem:[#allocation2 + $0x78] sm:$0xff] 0.0
    %49 = vst [vmem:[%s8] sm:$0xff] 0.0
  $region37: #{supervised_model_loss.5} parent=0 // pred_fallthru
    _
  %s50 = smul.u32 0, 128
  %s51 = sshra.s32 %s50, 3
  %s52 = sand.u32 %s50, 7
  %s53 = smul.addr %s51, 4
  %s54 = scalar_lea.vmem %s1, %s53
  %v55 = vld [vmem:[%s54] sm:$0xf]
  %v56 = vld [vmem:[%s54 + $0x4] sm:$0xf]
  %v57 = vld [vmem:[%s54 + $0x8] sm:$0xf]
  %v58 = vld [vmem:[%s54 + $0xc] sm:$0xf]
  %v59 = vld [vmem:[%s54 + $0x10] sm:$0xf]
  %v60 = vld [vmem:[%s54 + $0x14] sm:$0xf]
  %v61 = vld [vmem:[%s54 + $0x18] sm:$0xf]
  %v62 = vld [vmem:[%s54 + $0x1c] sm:$0xf]
  %v63 = vld [vmem:[%s54 + $0x20] sm:$0xf]
  %v64 = vld [vmem:[%s54 + $0x24] sm:$0xf]
  %v65 = vld [vmem:[%s54 + $0x28] sm:$0xf]
  %v66 = vld [vmem:[%s54 + $0x2c] sm:$0xf]
  %v67 = vld [vmem:[%s54 + $0x30] sm:$0xf]
  %v68 = vld [vmem:[%s54 + $0x34] sm:$0xf]
  %v69 = vld [vmem:[%s54 + $0x38] sm:$0xf]
  %v70 = vld [vmem:[%s54 + $0x3c] sm:$0xf]
  %v71 = vld [vmem:[#allocation2] sm:$0xff]
  %v72 = vld [vmem:[#allocation2 + $0x8] sm:$0xff]
  %v73 = vld [vmem:[#allocation2 + $0x10] sm:$0xff]
  %v74 = vld [vmem:[#allocation2 + $0x18] sm:$0xff]
  %v75 = vld [vmem:[#allocation2 + $0x20] sm:$0xff]
  %v76 = vld [vmem:[#allocation2 + $0x28] sm:$0xff]
  %v77 = vld [vmem:[#allocation2 + $0x30] sm:$0xff]
  %v78 = vld [vmem:[#allocation2 + $0x38] sm:$0xff]
  %v79 = vld [vmem:[#allocation2 + $0x40] sm:$0xff]
  %v80 = vld [vmem:[#allocation2 + $0x48] sm:$0xff]
  %v81 = vld [vmem:[#allocation2 + $0x50] sm:$0xff]
  %v82 = vld [vmem:[#allocation2 + $0x58] sm:$0xff]
  %v83 = vld [vmem:[#allocation2 + $0x60] sm:$0xff]
  %v84 = vld [vmem:[#allocation2 + $0x68] sm:$0xff]
  %v85 = vld [vmem:[#allocation2 + $0x70] sm:$0xff]
  %v86 = vld [vmem:[#allocation2 + $0x78] sm:$0xff]
  %v87 = vld [vmem:[%s0] sm:$0xf]
  %v88 = vld [vmem:[%s0 + $0x4] sm:$0xf]
  %v89 = vld [vmem:[%s0 + $0x8] sm:$0xf]
  %v90 = vld [vmem:[%s0 + $0xc] sm:$0xf]
  %v91 = vld [vmem:[%s0 + $0x10] sm:$0xf]
  %v92 = vld [vmem:[%s0 + $0x14] sm:$0xf]
  %v93 = vld [vmem:[%s0 + $0x18] sm:$0xf]
  %v94 = vld [vmem:[%s0 + $0x1c] sm:$0xf]
  %v95 = vld [vmem:[%s0 + $0x20] sm:$0xf]
  %v96 = vld [vmem:[%s0 + $0x24] sm:$0xf]
  %v97 = vld [vmem:[%s0 + $0x28] sm:$0xf]
  %v98 = vld [vmem:[%s0 + $0x2c] sm:$0xf]
  %v99 = vld [vmem:[%s0 + $0x30] sm:$0xf]
  %v100 = vld [vmem:[%s0 + $0x34] sm:$0xf]
  %v101 = vld [vmem:[%s0 + $0x38] sm:$0xf]
  %v102 = vld [vmem:[%s0 + $0x3c] sm:$0xf]
  %v119 = vunpack.c.l.b16 %v87
  %v120 = vunpack.c.l.b16 %v88
  %v121 = vunpack.c.l.b16 %v89
  %v122 = vunpack.c.l.b16 %v90
  %v123 = vunpack.c.l.b16 %v91
  %v124 = vunpack.c.l.b16 %v92
  %v125 = vunpack.c.l.b16 %v93
  %v126 = vunpack.c.l.b16 %v94
  %v127 = vunpack.c.l.b16 %v95
  %v128 = vunpack.c.l.b16 %v96
  %v129 = vunpack.c.l.b16 %v97
  %v130 = vunpack.c.l.b16 %v98
  %v131 = vunpack.c.l.b16 %v99
  %v132 = vunpack.c.l.b16 %v100
  %v133 = vunpack.c.l.b16 %v101
  %v134 = vunpack.c.l.b16 %v102
  %v135 = vpack.c.b16 %v120, %v119
  %v136 = vpack.c.b16 %v122, %v121
  %v137 = vpack.c.b16 %v124, %v123
  %v138 = vpack.c.b16 %v126, %v125
  %v139 = vpack.c.b16 %v128, %v127
  %v140 = vpack.c.b16 %v130, %v129
  %v141 = vpack.c.b16 %v132, %v131
  %v142 = vpack.c.b16 %v134, %v133
  %v167 = vunpack.c.l.b16 %v55
  %v168 = vunpack.c.l.b16 %v56
  %v169 = vunpack.c.l.b16 %v57
  %v170 = vunpack.c.l.b16 %v58
  %v171 = vunpack.c.l.b16 %v59
  %v172 = vunpack.c.l.b16 %v60
  %v173 = vunpack.c.l.b16 %v61
  %v174 = vunpack.c.l.b16 %v62
  %v175 = vunpack.c.l.b16 %v63
  %v176 = vunpack.c.l.b16 %v64
  %v177 = vunpack.c.l.b16 %v65
  %v178 = vunpack.c.l.b16 %v66
  %v179 = vunpack.c.l.b16 %v67
  %v180 = vunpack.c.l.b16 %v68
  %v181 = vunpack.c.l.b16 %v69
  %v182 = vunpack.c.l.b16 %v70
  %v183 = vpack.c.b16 %v168, %v167
  %v184 = vpack.c.b16 %v170, %v169
  %v185 = vpack.c.b16 %v172, %v171
  %v186 = vpack.c.b16 %v174, %v173
  %v187 = vpack.c.b16 %v176, %v175
  %v188 = vpack.c.b16 %v178, %v177
  %v189 = vpack.c.b16 %v180, %v179
  %v190 = vpack.c.b16 %v182, %v181
  %199 = vmatpush.bf16.msra.mxu0 %v190
  %200 = vmatpush.bf16.msra.mxu0 %v189
  %201 = vmatpush.bf16.msra.mxu0 %v188
  %202 = vmatpush.bf16.msra.mxu0 %v187
  %203 = vmatpush.bf16.msra.mxu0 %v186
  %204 = vmatpush.bf16.msra.mxu0 %v185
  %205 = vmatpush.bf16.msra.mxu0 %v184
  %206 = vmatpush.bf16.msra.mxu0 %v183
  %207 = vmatmul.bf16.gmra.mxu0 %v135
  %v208 = vpop.f32.mrf.mxu0
  %v209 = vadd.f32 0.0, %v208
  %v210 = vpop.f32.mrf.mxu0
  %v211 = vadd.f32 0.0, %v210
  %212 = vmatmul.bf16.gmra.mxu0 %v136
  %v213 = vpop.f32.mrf.mxu0
  %v214 = vadd.f32 0.0, %v213
  %v215 = vpop.f32.mrf.mxu0
  %v216 = vadd.f32 0.0, %v215
  %217 = vmatmul.bf16.gmra.mxu0 %v137
  %v218 = vpop.f32.mrf.mxu0
  %v219 = vadd.f32 0.0, %v218
  %v220 = vpop.f32.mrf.mxu0
  %v221 = vadd.f32 0.0, %v220
  %222 = vmatmul.bf16.gmra.mxu0 %v138
  %v223 = vpop.f32.mrf.mxu0
  %v224 = vadd.f32 0.0, %v223
  %v225 = vpop.f32.mrf.mxu0
  %v226 = vadd.f32 0.0, %v225
  %227 = vmatmul.bf16.gmra.mxu0 %v139
  %v228 = vpop.f32.mrf.mxu0
  %v229 = vadd.f32 0.0, %v228
  %v230 = vpop.f32.mrf.mxu0
  %v231 = vadd.f32 0.0, %v230
  %232 = vmatmul.bf16.gmra.mxu0 %v140
  %v233 = vpop.f32.mrf.mxu0
  %v234 = vadd.f32 0.0, %v233
  %v235 = vpop.f32.mrf.mxu0
  %v236 = vadd.f32 0.0, %v235
  %237 = vmatmul.bf16.gmra.mxu0 %v141
  %v238 = vpop.f32.mrf.mxu0
  %v239 = vadd.f32 0.0, %v238
  %v240 = vpop.f32.mrf.mxu0
  %v241 = vadd.f32 0.0, %v240
  %242 = vmatmul.bf16.gmra.mxu0 %v142
  %v243 = vpop.f32.mrf.mxu0
  %v244 = vadd.f32 0.0, %v243
  %v245 = vpop.f32.mrf.mxu0
  %v246 = vadd.f32 0.0, %v245
  %247 = vdwg.mxu0
  %v248 = vadd.f32 %v71, %v209
  %v249 = vadd.f32 %v72, %v211
  %v250 = vadd.f32 %v73, %v214
  %v251 = vadd.f32 %v74, %v216
  %v252 = vadd.f32 %v75, %v219
  %v253 = vadd.f32 %v76, %v221
  %v254 = vadd.f32 %v77, %v224
  %v255 = vadd.f32 %v78, %v226
  %v256 = vadd.f32 %v79, %v229
  %v257 = vadd.f32 %v80, %v231
  %v258 = vadd.f32 %v81, %v234
  %v259 = vadd.f32 %v82, %v236
  %v260 = vadd.f32 %v83, %v239
  %v261 = vadd.f32 %v84, %v241
  %v262 = vadd.f32 %v85, %v244
  %v263 = vadd.f32 %v86, %v246
  %264 = vst [vmem:[#allocation2] sm:$0xff] %v248
  %265 = vst [vmem:[#allocation2 + $0x8] sm:$0xff] %v249
  %266 = vst [vmem:[#allocation2 + $0x10] sm:$0xff] %v250
  %267 = vst [vmem:[#allocation2 + $0x18] sm:$0xff] %v251
  %268 = vst [vmem:[#allocation2 + $0x20] sm:$0xff] %v252
  %269 = vst [vmem:[#allocation2 + $0x28] sm:$0xff] %v253
  %270 = vst [vmem:[#allocation2 + $0x30] sm:$0xff] %v254
  %271 = vst [vmem:[#allocation2 + $0x38] sm:$0xff] %v255
  %272 = vst [vmem:[#allocation2 + $0x40] sm:$0xff] %v256
  %273 = vst [vmem:[#allocation2 + $0x48] sm:$0xff] %v257
  %274 = vst [vmem:[#allocation2 + $0x50] sm:$0xff] %v258
  %275 = vst [vmem:[#allocation2 + $0x58] sm:$0xff] %v259
  %276 = vst [vmem:[#allocation2 + $0x60] sm:$0xff] %v260
  %277 = vst [vmem:[#allocation2 + $0x68] sm:$0xff] %v261
  %278 = vst [vmem:[#allocation2 + $0x70] sm:$0xff] %v262
  %279 = vst [vmem:[#allocation2 + $0x78] sm:$0xff] %v263
  // Predicated region
  $region38: #{supervised_model_loss.5} parent=0 // pred_check
    %p280 = pneg %p29
  $region39: #{supervised_model_loss.5} parent=0 // pred_check_branch
    %282 = sbr.rel (%p280) target = $region41
  $region40: #{supervised_model_loss.5} parent=0 // pred_region
    %v283 = vld [vmem:[#allocation2] sm:$0xff]
    %v284 = vld [vmem:[#allocation2 + $0x8] sm:$0xff]
    %v285 = vld [vmem:[#allocation2 + $0x10] sm:$0xff]
    %v286 = vld [vmem:[#allocation2 + $0x18] sm:$0xff]
    %v287 = vld [vmem:[#allocation2 + $0x20] sm:$0xff]
    %v288 = vld [vmem:[#allocation2 + $0x28] sm:$0xff]
    %v289 = vld [vmem:[#allocation2 + $0x30] sm:$0xff]
    %v290 = vld [vmem:[#allocation2 + $0x38] sm:$0xff]
    %v291 = vld [vmem:[#allocation2 + $0x40] sm:$0xff]
    %v292 = vld [vmem:[#allocation2 + $0x48] sm:$0xff]
    %v293 = vld [vmem:[#allocation2 + $0x50] sm:$0xff]
    %v294 = vld [vmem:[#allocation2 + $0x58] sm:$0xff]
    %v295 = vld [vmem:[#allocation2 + $0x60] sm:$0xff]
    %v296 = vld [vmem:[#allocation2 + $0x68] sm:$0xff]
    %v297 = vld [vmem:[#allocation2 + $0x70] sm:$0xff]
    %v298 = vld [vmem:[#allocation2 + $0x78] sm:$0xff]
    %v299 = vld [vmem:[%s2] sm:$0x1]
    %v301 = vperm.slane %v299, 0
    %v303 = vadd.f32 %v283, %v301
    %v304 = vadd.f32 %v284, %v301
    %v305 = vadd.f32 %v285, %v301
    %v306 = vadd.f32 %v286, %v301
    %v307 = vadd.f32 %v287, %v301
    %v308 = vadd.f32 %v288, %v301
    %v309 = vadd.f32 %v289, %v301
    %v310 = vadd.f32 %v290, %v301
    %v311 = vadd.f32 %v291, %v301
    %v312 = vadd.f32 %v292, %v301
    %v313 = vadd.f32 %v293, %v301
    %v314 = vadd.f32 %v294, %v301
    %v315 = vadd.f32 %v295, %v301
    %v316 = vadd.f32 %v296, %v301
    %v317 = vadd.f32 %v297, %v301
    %v318 = vadd.f32 %v298, %v301
    %v319 = vmax.f32 %v303, 0.0
    %v320 = vmax.f32 %v304, 0.0
    %v321 = vmax.f32 %v305, 0.0
    %v322 = vmax.f32 %v306, 0.0
    %v323 = vmax.f32 %v307, 0.0
    %v324 = vmax.f32 %v308, 0.0
    %v325 = vmax.f32 %v309, 0.0
    %v326 = vmax.f32 %v310, 0.0
    %v327 = vmax.f32 %v311, 0.0
    %v328 = vmax.f32 %v312, 0.0
    %v329 = vmax.f32 %v313, 0.0
    %v330 = vmax.f32 %v314, 0.0
    %v331 = vmax.f32 %v315, 0.0
    %v332 = vmax.f32 %v316, 0.0
    %v333 = vmax.f32 %v317, 0.0
    %v334 = vmax.f32 %v318, 0.0
    %v335 = vpack.c.bf16 %v320, %v319
    %v336 = vpack.c.bf16 %v322, %v321
    %v337 = vpack.c.bf16 %v324, %v323
    %v338 = vpack.c.bf16 %v326, %v325
    %v339 = vpack.c.bf16 %v328, %v327
    %v340 = vpack.c.bf16 %v330, %v329
    %v341 = vpack.c.bf16 %v332, %v331
    %v342 = vpack.c.bf16 %v334, %v333
    %v343 = vld [vmem:[%s3] sm:$0xf]
    %v344 = vld [vmem:[%s3 + $0x4] sm:$0xf]
    %v345 = vld [vmem:[%s3 + $0x8] sm:$0xf]
    %v346 = vld [vmem:[%s3 + $0xc] sm:$0xf]
    %v347 = vld [vmem:[%s3 + $0x10] sm:$0xf]
    %v348 = vld [vmem:[%s3 + $0x14] sm:$0xf]
    %v349 = vld [vmem:[%s3 + $0x18] sm:$0xf]
    %v350 = vld [vmem:[%s3 + $0x1c] sm:$0xf]
    %v351 = vld [vmem:[%s3 + $0x20] sm:$0xf]
    %v352 = vld [vmem:[%s3 + $0x24] sm:$0xf]
    %v353 = vld [vmem:[%s3 + $0x28] sm:$0xf]
    %v354 = vld [vmem:[%s3 + $0x2c] sm:$0xf]
    %v355 = vld [vmem:[%s3 + $0x30] sm:$0xf]
    %v356 = vld [vmem:[%s3 + $0x34] sm:$0xf]
    %v357 = vld [vmem:[%s3 + $0x38] sm:$0xf]
    %v358 = vld [vmem:[%s3 + $0x3c] sm:$0xf]
    %v359 = vld [vmem:[%s4] sm:$0x1]
    %v361 = vperm.slane %v359, 0
    %v379 = vunpack.c.l.b16 %v343
    %v380 = vunpack.c.l.b16 %v344
    %v381 = vunpack.c.l.b16 %v345
    %v382 = vunpack.c.l.b16 %v346
    %v383 = vunpack.c.l.b16 %v347
    %v384 = vunpack.c.l.b16 %v348
    %v385 = vunpack.c.l.b16 %v349
    %v386 = vunpack.c.l.b16 %v350
    %v387 = vunpack.c.l.b16 %v351
    %v388 = vunpack.c.l.b16 %v352
    %v389 = vunpack.c.l.b16 %v353
    %v390 = vunpack.c.l.b16 %v354
    %v391 = vunpack.c.l.b16 %v355
    %v392 = vunpack.c.l.b16 %v356
    %v393 = vunpack.c.l.b16 %v357
    %v394 = vunpack.c.l.b16 %v358
    %v395 = vpack.c.b16 %v380, %v379
    %v396 = vpack.c.b16 %v382, %v381
    %v397 = vpack.c.b16 %v384, %v383
    %v398 = vpack.c.b16 %v386, %v385
    %v399 = vpack.c.b16 %v388, %v387
    %v400 = vpack.c.b16 %v390, %v389
    %v401 = vpack.c.b16 %v392, %v391
    %v402 = vpack.c.b16 %v394, %v393
    %411 = vmatpush.bf16.msra.mxu0 %v402
    %412 = vmatpush.bf16.msra.mxu0 %v401
    %413 = vmatpush.bf16.msra.mxu0 %v400
    %414 = vmatpush.bf16.msra.mxu0 %v399
    %415 = vmatpush.bf16.msra.mxu0 %v398
    %416 = vmatpush.bf16.msra.mxu0 %v397
    %417 = vmatpush.bf16.msra.mxu0 %v396
    %418 = vmatpush.bf16.msra.mxu0 %v395
    %419 = vmatmul.bf16.gmra.mxu0 %v335
    %v420 = vpop.f32.mrf.mxu0
    %v421 = vadd.f32 %v361, %v420
    %v422 = vpop.f32.mrf.mxu0
    %v423 = vadd.f32 %v361, %v422
    %424 = vmatmul.bf16.gmra.mxu0 %v336
    %v425 = vpop.f32.mrf.mxu0
    %v426 = vadd.f32 %v361, %v425
    %v427 = vpop.f32.mrf.mxu0
    %v428 = vadd.f32 %v361, %v427
    %429 = vmatmul.bf16.gmra.mxu0 %v337
    %v430 = vpop.f32.mrf.mxu0
    %v431 = vadd.f32 %v361, %v430
    %v432 = vpop.f32.mrf.mxu0
    %v433 = vadd.f32 %v361, %v432
    %434 = vmatmul.bf16.gmra.mxu0 %v338
    %v435 = vpop.f32.mrf.mxu0
    %v436 = vadd.f32 %v361, %v435
    %v437 = vpop.f32.mrf.mxu0
    %v438 = vadd.f32 %v361, %v437
    %439 = vmatmul.bf16.gmra.mxu0 %v339
    %v440 = vpop.f32.mrf.mxu0
    %v441 = vadd.f32 %v361, %v440
    %v442 = vpop.f32.mrf.mxu0
    %v443 = vadd.f32 %v361, %v442
    %444 = vmatmul.bf16.gmra.mxu0 %v340
    %v445 = vpop.f32.mrf.mxu0
    %v446 = vadd.f32 %v361, %v445
    %v447 = vpop.f32.mrf.mxu0
    %v448 = vadd.f32 %v361, %v447
    %449 = vmatmul.bf16.gmra.mxu0 %v341
    %v450 = vpop.f32.mrf.mxu0
    %v451 = vadd.f32 %v361, %v450
    %v452 = vpop.f32.mrf.mxu0
    %v453 = vadd.f32 %v361, %v452
    %454 = vmatmul.bf16.gmra.mxu0 %v342
    %v455 = vpop.f32.mrf.mxu0
    %v456 = vadd.f32 %v361, %v455
    %v457 = vpop.f32.mrf.mxu0
    %v458 = vadd.f32 %v361, %v457
    %459 = vdwg.mxu0
    %vm460 = vcmp.gt.f32.partialorder %v421, 0.0
    %vm461 = vcmp.gt.f32.partialorder %v423, 0.0
    %vm462 = vcmp.gt.f32.partialorder %v426, 0.0
    %vm463 = vcmp.gt.f32.partialorder %v428, 0.0
    %vm464 = vcmp.gt.f32.partialorder %v431, 0.0
    %vm465 = vcmp.gt.f32.partialorder %v433, 0.0
    %vm466 = vcmp.gt.f32.partialorder %v436, 0.0
    %vm467 = vcmp.gt.f32.partialorder %v438, 0.0
    %vm468 = vcmp.gt.f32.partialorder %v441, 0.0
    %vm469 = vcmp.gt.f32.partialorder %v443, 0.0
    %vm470 = vcmp.gt.f32.partialorder %v446, 0.0
    %vm471 = vcmp.gt.f32.partialorder %v448, 0.0
    %vm472 = vcmp.gt.f32.partialorder %v451, 0.0
    %vm473 = vcmp.gt.f32.partialorder %v453, 0.0
    %vm474 = vcmp.gt.f32.partialorder %v456, 0.0
    %vm475 = vcmp.gt.f32.partialorder %v458, 0.0
    %v476 = vmul.f32 %v421, 0.01
    %v477 = vmul.f32 %v423, 0.01
    %v478 = vmul.f32 %v426, 0.01
    %v479 = vmul.f32 %v428, 0.01
    %v480 = vmul.f32 %v431, 0.01
    %v481 = vmul.f32 %v433, 0.01
    %v482 = vmul.f32 %v436, 0.01
    %v483 = vmul.f32 %v438, 0.01
    %v484 = vmul.f32 %v441, 0.01
    %v485 = vmul.f32 %v443, 0.01
    %v486 = vmul.f32 %v446, 0.01
    %v487 = vmul.f32 %v448, 0.01
    %v488 = vmul.f32 %v451, 0.01
    %v489 = vmul.f32 %v453, 0.01
    %v490 = vmul.f32 %v456, 0.01
    %v491 = vmul.f32 %v458, 0.01
    %v492 = vsel %vm460, %v421, %v476
    %v493 = vsel %vm461, %v423, %v477
    %v494 = vsel %vm462, %v426, %v478
    %v495 = vsel %vm463, %v428, %v479
    %v496 = vsel %vm464, %v431, %v480
    %v497 = vsel %vm465, %v433, %v481
    %v498 = vsel %vm466, %v436, %v482
    %v499 = vsel %vm467, %v438, %v483
    %v500 = vsel %vm468, %v441, %v484
    %v501 = vsel %vm469, %v443, %v485
    %v502 = vsel %vm470, %v446, %v486
    %v503 = vsel %vm471, %v448, %v487
    %v504 = vsel %vm472, %v451, %v488
    %v505 = vsel %vm473, %v453, %v489
    %v506 = vsel %vm474, %v456, %v490
    %v507 = vsel %vm475, %v458, %v491
    %v508 = vpack.c.bf16 %v493, %v492
    %v509 = vpack.c.bf16 %v495, %v494
    %v510 = vpack.c.bf16 %v497, %v496
    %v511 = vpack.c.bf16 %v499, %v498
    %v512 = vpack.c.bf16 %v501, %v500
    %v513 = vpack.c.bf16 %v503, %v502
    %v514 = vpack.c.bf16 %v505, %v504
    %v515 = vpack.c.bf16 %v507, %v506
    %v516 = vld [vmem:[%s5] sm:$0xf]
    %v517 = vld [vmem:[%s5 + $0x4] sm:$0xf]
    %v518 = vld [vmem:[%s5 + $0x8] sm:$0xf]
    %v519 = vld [vmem:[%s5 + $0xc] sm:$0xf]
    %v520 = vld [vmem:[%s5 + $0x10] sm:$0xf]
    %v521 = vld [vmem:[%s5 + $0x14] sm:$0xf]
    %v522 = vld [vmem:[%s5 + $0x18] sm:$0xf]
    %v523 = vld [vmem:[%s5 + $0x1c] sm:$0xf]
    %v524 = vld [vmem:[%s5 + $0x20] sm:$0xf]
    %v525 = vld [vmem:[%s5 + $0x24] sm:$0xf]
    %v526 = vld [vmem:[%s5 + $0x28] sm:$0xf]
    %v527 = vld [vmem:[%s5 + $0x2c] sm:$0xf]
    %v528 = vld [vmem:[%s5 + $0x30] sm:$0xf]
    %v529 = vld [vmem:[%s5 + $0x34] sm:$0xf]
    %v530 = vld [vmem:[%s5 + $0x38] sm:$0xf]
    %v531 = vld [vmem:[%s5 + $0x3c] sm:$0xf]
    %v532 = vld [vmem:[%s6] sm:$0x1]
    %v534 = vperm.slane %v532, 0
    %v552 = vunpack.c.l.b16 %v516
    %v553 = vunpack.c.l.b16 %v517
    %v554 = vunpack.c.l.b16 %v518
    %v555 = vunpack.c.l.b16 %v519
    %v556 = vunpack.c.l.b16 %v520
    %v557 = vunpack.c.l.b16 %v521
    %v558 = vunpack.c.l.b16 %v522
    %v559 = vunpack.c.l.b16 %v523
    %v560 = vunpack.c.l.b16 %v524
    %v561 = vunpack.c.l.b16 %v525
    %v562 = vunpack.c.l.b16 %v526
    %v563 = vunpack.c.l.b16 %v527
    %v564 = vunpack.c.l.b16 %v528
    %v565 = vunpack.c.l.b16 %v529
    %v566 = vunpack.c.l.b16 %v530
    %v567 = vunpack.c.l.b16 %v531
    %v568 = vpack.c.b16 %v553, %v552
    %v569 = vpack.c.b16 %v555, %v554
    %v570 = vpack.c.b16 %v557, %v556
    %v571 = vpack.c.b16 %v559, %v558
    %v572 = vpack.c.b16 %v561, %v560
    %v573 = vpack.c.b16 %v563, %v562
    %v574 = vpack.c.b16 %v565, %v564
    %v575 = vpack.c.b16 %v567, %v566
    %584 = vmatpush.bf16.msra.mxu0 %v575
    %585 = vmatpush.bf16.msra.mxu0 %v574
    %586 = vmatpush.bf16.msra.mxu0 %v573
    %587 = vmatpush.bf16.msra.mxu0 %v572
    %588 = vmatpush.bf16.msra.mxu0 %v571
    %589 = vmatpush.bf16.msra.mxu0 %v570
    %590 = vmatpush.bf16.msra.mxu0 %v569
    %591 = vmatpush.bf16.msra.mxu0 %v568
    %592 = vmatmul.bf16.gmra.mxu0 %v508
    %v593 = vpop.f32.mrf.mxu0
    %v594 = vadd.f32 %v534, %v593
    %v595 = vpop.f32.mrf.mxu0
    %v596 = vadd.f32 %v534, %v595
    %597 = vmatmul.bf16.gmra.mxu0 %v509
    %v598 = vpop.f32.mrf.mxu0
    %v599 = vadd.f32 %v534, %v598
    %v600 = vpop.f32.mrf.mxu0
    %v601 = vadd.f32 %v534, %v600
    %602 = vmatmul.bf16.gmra.mxu0 %v510
    %v603 = vpop.f32.mrf.mxu0
    %v604 = vadd.f32 %v534, %v603
    %v605 = vpop.f32.mrf.mxu0
    %v606 = vadd.f32 %v534, %v605
    %607 = vmatmul.bf16.gmra.mxu0 %v511
    %v608 = vpop.f32.mrf.mxu0
    %v609 = vadd.f32 %v534, %v608
    %v610 = vpop.f32.mrf.mxu0
    %v611 = vadd.f32 %v534, %v610
    %612 = vmatmul.bf16.gmra.mxu0 %v512
    %v613 = vpop.f32.mrf.mxu0
    %v614 = vadd.f32 %v534, %v613
    %v615 = vpop.f32.mrf.mxu0
    %v616 = vadd.f32 %v534, %v615
    %617 = vmatmul.bf16.gmra.mxu0 %v513
    %v618 = vpop.f32.mrf.mxu0
    %v619 = vadd.f32 %v534, %v618
    %v620 = vpop.f32.mrf.mxu0
    %v621 = vadd.f32 %v534, %v620
    %622 = vmatmul.bf16.gmra.mxu0 %v514
    %v623 = vpop.f32.mrf.mxu0
    %v624 = vadd.f32 %v534, %v623
    %v625 = vpop.f32.mrf.mxu0
    %v626 = vadd.f32 %v534, %v625
    %627 = vmatmul.bf16.gmra.mxu0 %v515
    %v628 = vpop.f32.mrf.mxu0
    %v629 = vadd.f32 %v534, %v628
    %v630 = vpop.f32.mrf.mxu0
    %v631 = vadd.f32 %v534, %v630
    %632 = vdwg.mxu0
    %vm633 = vcmask 31744
    %v634 = vsel %vm633, %v594, -inf
    %635 = vmax.xlane.f32.xlu0 %v634
    %v636 = vpop.xlane.xlu0 %635
    %v637 = vsel %vm633, %v596, -inf
    %638 = vmax.xlane.f32.xlu0 %v637
    %v639 = vpop.xlane.xlu0 %638
    %v640 = vsel %vm633, %v599, -inf
    %641 = vmax.xlane.f32.xlu0 %v640
    %v642 = vpop.xlane.xlu0 %641
    %v643 = vsel %vm633, %v601, -inf
    %644 = vmax.xlane.f32.xlu0 %v643
    %v645 = vpop.xlane.xlu0 %644
    %v646 = vsel %vm633, %v604, -inf
    %647 = vmax.xlane.f32.xlu0 %v646
    %v648 = vpop.xlane.xlu0 %647
    %v649 = vsel %vm633, %v606, -inf
    %650 = vmax.xlane.f32.xlu0 %v649
    %v651 = vpop.xlane.xlu0 %650
    %v652 = vsel %vm633, %v609, -inf
    %653 = vmax.xlane.f32.xlu0 %v652
    %v654 = vpop.xlane.xlu0 %653
    %v655 = vsel %vm633, %v611, -inf
    %656 = vmax.xlane.f32.xlu0 %v655
    %v657 = vpop.xlane.xlu0 %656
    %v658 = vsel %vm633, %v614, -inf
    %659 = vmax.xlane.f32.xlu0 %v658
    %v660 = vpop.xlane.xlu0 %659
    %v661 = vsel %vm633, %v616, -inf
    %662 = vmax.xlane.f32.xlu0 %v661
    %v663 = vpop.xlane.xlu0 %662
    %v664 = vsel %vm633, %v619, -inf
    %665 = vmax.xlane.f32.xlu0 %v664
    %v666 = vpop.xlane.xlu0 %665
    %v667 = vsel %vm633, %v621, -inf
    %668 = vmax.xlane.f32.xlu0 %v667
    %v669 = vpop.xlane.xlu0 %668
    %v670 = vsel %vm633, %v624, -inf
    %671 = vmax.xlane.f32.xlu0 %v670
    %v672 = vpop.xlane.xlu0 %671
    %v673 = vsel %vm633, %v626, -inf
    %674 = vmax.xlane.f32.xlu0 %v673
    %v675 = vpop.xlane.xlu0 %674
    %v676 = vsel %vm633, %v629, -inf
    %677 = vmax.xlane.f32.xlu0 %v676
    %v678 = vpop.xlane.xlu0 %677
    %v679 = vsel %vm633, %v631, -inf
    %680 = vmax.xlane.f32.xlu0 %v679
    %v681 = vpop.xlane.xlu0 %680
    %v682 = vsub.f32 %v594, %v636
    %v683 = vsub.f32 %v596, %v639
    %v684 = vsub.f32 %v599, %v642
    %v685 = vsub.f32 %v601, %v645
    %v686 = vsub.f32 %v604, %v648
    %v687 = vsub.f32 %v606, %v651
    %v688 = vsub.f32 %v609, %v654
    %v689 = vsub.f32 %v611, %v657
    %v690 = vsub.f32 %v614, %v660
    %v691 = vsub.f32 %v616, %v663
    %v692 = vsub.f32 %v619, %v666
    %v693 = vsub.f32 %v621, %v669
    %v694 = vsub.f32 %v624, %v672
    %v695 = vsub.f32 %v626, %v675
    %v696 = vsub.f32 %v629, %v678
    %v697 = vsub.f32 %v631, %v681
    %v698 = vmul.f32 %v682, 1.442695
    %v699 = vpow.pop %v698
    %v700 = vmul.f32 %v683, 1.442695
    %v701 = vpow.pop %v700
    %v702 = vmul.f32 %v684, 1.442695
    %v703 = vpow.pop %v702
    %v704 = vmul.f32 %v685, 1.442695
    %v705 = vpow.pop %v704
    %v706 = vmul.f32 %v686, 1.442695
    %v707 = vpow.pop %v706
    %v708 = vmul.f32 %v687, 1.442695
    %v709 = vpow.pop %v708
    %v710 = vmul.f32 %v688, 1.442695
    %v711 = vpow.pop %v710
    %v712 = vmul.f32 %v689, 1.442695
    %v713 = vpow.pop %v712
    %v714 = vmul.f32 %v690, 1.442695
    %v715 = vpow.pop %v714
    %v716 = vmul.f32 %v691, 1.442695
    %v717 = vpow.pop %v716
    %v718 = vmul.f32 %v692, 1.442695
    %v719 = vpow.pop %v718
    %v720 = vmul.f32 %v693, 1.442695
    %v721 = vpow.pop %v720
    %v722 = vmul.f32 %v694, 1.442695
    %v723 = vpow.pop %v722
    %v724 = vmul.f32 %v695, 1.442695
    %v725 = vpow.pop %v724
    %v726 = vmul.f32 %v696, 1.442695
    %v727 = vpow.pop %v726
    %v728 = vmul.f32 %v697, 1.442695
    %v729 = vpow.pop %v728
    %v730 = vsel %vm633, %v699, 0.0
    %731 = vadd.xlane.f32.xlu0 %v730
    %v732 = vpop.xlane.xlu0 %731
    %v733 = vsel %vm633, %v701, 0.0
    %734 = vadd.xlane.f32.xlu0 %v733
    %v735 = vpop.xlane.xlu0 %734
    %v736 = vsel %vm633, %v703, 0.0
    %737 = vadd.xlane.f32.xlu0 %v736
    %v738 = vpop.xlane.xlu0 %737
    %v739 = vsel %vm633, %v705, 0.0
    %740 = vadd.xlane.f32.xlu0 %v739
    %v741 = vpop.xlane.xlu0 %740
    %v742 = vsel %vm633, %v707, 0.0
    %743 = vadd.xlane.f32.xlu0 %v742
    %v744 = vpop.xlane.xlu0 %743
    %v745 = vsel %vm633, %v709, 0.0
    %746 = vadd.xlane.f32.xlu0 %v745
    %v747 = vpop.xlane.xlu0 %746
    %v748 = vsel %vm633, %v711, 0.0
    %749 = vadd.xlane.f32.xlu0 %v748
    %v750 = vpop.xlane.xlu0 %749
    %v751 = vsel %vm633, %v713, 0.0
    %752 = vadd.xlane.f32.xlu0 %v751
    %v753 = vpop.xlane.xlu0 %752
    %v754 = vsel %vm633, %v715, 0.0
    %755 = vadd.xlane.f32.xlu0 %v754
    %v756 = vpop.xlane.xlu0 %755
    %v757 = vsel %vm633, %v717, 0.0
    %758 = vadd.xlane.f32.xlu0 %v757
    %v759 = vpop.xlane.xlu0 %758
    %v760 = vsel %vm633, %v719, 0.0
    %761 = vadd.xlane.f32.xlu0 %v760
    %v762 = vpop.xlane.xlu0 %761
    %v763 = vsel %vm633, %v721, 0.0
    %764 = vadd.xlane.f32.xlu0 %v763
    %v765 = vpop.xlane.xlu0 %764
    %v766 = vsel %vm633, %v723, 0.0
    %767 = vadd.xlane.f32.xlu0 %v766
    %v768 = vpop.xlane.xlu0 %767
    %v769 = vsel %vm633, %v725, 0.0
    %770 = vadd.xlane.f32.xlu0 %v769
    %v771 = vpop.xlane.xlu0 %770
    %v772 = vsel %vm633, %v727, 0.0
    %773 = vadd.xlane.f32.xlu0 %v772
    %v774 = vpop.xlane.xlu0 %773
    %v775 = vsel %vm633, %v729, 0.0
    %776 = vadd.xlane.f32.xlu0 %v775
    %v777 = vpop.xlane.xlu0 %776
    %v778 = vlog2.pop %v732
    %v779 = vmul.f32 %v778, 0.6931472
    %v780 = vlog2.pop %v735
    %v781 = vmul.f32 %v780, 0.6931472
    %v782 = vlog2.pop %v738
    %v783 = vmul.f32 %v782, 0.6931472
    %v784 = vlog2.pop %v741
    %v785 = vmul.f32 %v784, 0.6931472
    %v786 = vlog2.pop %v744
    %v787 = vmul.f32 %v786, 0.6931472
    %v788 = vlog2.pop %v747
    %v789 = vmul.f32 %v788, 0.6931472
    %v790 = vlog2.pop %v750
    %v791 = vmul.f32 %v790, 0.6931472
    %v792 = vlog2.pop %v753
    %v793 = vmul.f32 %v792, 0.6931472
    %v794 = vlog2.pop %v756
    %v795 = vmul.f32 %v794, 0.6931472
    %v796 = vlog2.pop %v759
    %v797 = vmul.f32 %v796, 0.6931472
    %v798 = vlog2.pop %v762
    %v799 = vmul.f32 %v798, 0.6931472
    %v800 = vlog2.pop %v765
    %v801 = vmul.f32 %v800, 0.6931472
    %v802 = vlog2.pop %v768
    %v803 = vmul.f32 %v802, 0.6931472
    %v804 = vlog2.pop %v771
    %v805 = vmul.f32 %v804, 0.6931472
    %v806 = vlog2.pop %v774
    %v807 = vmul.f32 %v806, 0.6931472
    %v808 = vlog2.pop %v777
    %v809 = vmul.f32 %v808, 0.6931472
    %v810 = vadd.f32 %v636, %v779
    %v811 = vadd.f32 %v639, %v781
    %v812 = vadd.f32 %v642, %v783
    %v813 = vadd.f32 %v645, %v785
    %v814 = vadd.f32 %v648, %v787
    %v815 = vadd.f32 %v651, %v789
    %v816 = vadd.f32 %v654, %v791
    %v817 = vadd.f32 %v657, %v793
    %v818 = vadd.f32 %v660, %v795
    %v819 = vadd.f32 %v663, %v797
    %v820 = vadd.f32 %v666, %v799
    %v821 = vadd.f32 %v669, %v801
    %v822 = vadd.f32 %v672, %v803
    %v823 = vadd.f32 %v675, %v805
    %v824 = vadd.f32 %v678, %v807
    %v825 = vadd.f32 %v681, %v809
    %v826 = vld [vmem:[%s7] sm:$0xff]
    %v827 = vld [vmem:[%s7 + $0x8] sm:$0xff]
    %v828 = vld [vmem:[%s7 + $0x10] sm:$0xff]
    %v829 = vld [vmem:[%s7 + $0x18] sm:$0xff]
    %v830 = vld [vmem:[%s7 + $0x20] sm:$0xff]
    %v831 = vld [vmem:[%s7 + $0x28] sm:$0xff]
    %v832 = vld [vmem:[%s7 + $0x30] sm:$0xff]
    %v833 = vld [vmem:[%s7 + $0x38] sm:$0xff]
    %v834 = vld [vmem:[%s7 + $0x40] sm:$0xff]
    %v835 = vld [vmem:[%s7 + $0x48] sm:$0xff]
    %v836 = vld [vmem:[%s7 + $0x50] sm:$0xff]
    %v837 = vld [vmem:[%s7 + $0x58] sm:$0xff]
    %v838 = vld [vmem:[%s7 + $0x60] sm:$0xff]
    %v839 = vld [vmem:[%s7 + $0x68] sm:$0xff]
    %v840 = vld [vmem:[%s7 + $0x70] sm:$0xff]
    %v841 = vld [vmem:[%s7 + $0x78] sm:$0xff]
    %v842 = vsub.f32 %v810, %v594
    %v843 = vsub.f32 %v811, %v596
    %v844 = vsub.f32 %v812, %v599
    %v845 = vsub.f32 %v813, %v601
    %v846 = vsub.f32 %v814, %v604
    %v847 = vsub.f32 %v815, %v606
    %v848 = vsub.f32 %v816, %v609
    %v849 = vsub.f32 %v817, %v611
    %v850 = vsub.f32 %v818, %v614
    %v851 = vsub.f32 %v819, %v616
    %v852 = vsub.f32 %v820, %v619
    %v853 = vsub.f32 %v821, %v621
    %v854 = vsub.f32 %v822, %v624
    %v855 = vsub.f32 %v823, %v626
    %v856 = vsub.f32 %v824, %v629
    %v857 = vsub.f32 %v825, %v631
    %v858 = vmul.f32 %v826, %v842
    %v859 = vmul.f32 %v827, %v843
    %v860 = vmul.f32 %v828, %v844
    %v861 = vmul.f32 %v829, %v845
    %v862 = vmul.f32 %v830, %v846
    %v863 = vmul.f32 %v831, %v847
    %v864 = vmul.f32 %v832, %v848
    %v865 = vmul.f32 %v833, %v849
    %v866 = vmul.f32 %v834, %v850
    %v867 = vmul.f32 %v835, %v851
    %v868 = vmul.f32 %v836, %v852
    %v869 = vmul.f32 %v837, %v853
    %v870 = vmul.f32 %v838, %v854
    %v871 = vmul.f32 %v839, %v855
    %v872 = vmul.f32 %v840, %v856
    %v873 = vmul.f32 %v841, %v857
    %v874 = vsel %vm633, %v858, 0.0
    %v875 = vsel %vm633, %v859, 0.0
    %v876 = vadd.f32 %v874, %v875
    %v877 = vsel %vm633, %v860, 0.0
    %v878 = vadd.f32 %v876, %v877
    %v879 = vsel %vm633, %v861, 0.0
    %v880 = vadd.f32 %v878, %v879
    %v881 = vsel %vm633, %v862, 0.0
    %v882 = vadd.f32 %v880, %v881
    %v883 = vsel %vm633, %v863, 0.0
    %v884 = vadd.f32 %v882, %v883
    %v885 = vsel %vm633, %v864, 0.0
    %v886 = vadd.f32 %v884, %v885
    %v887 = vsel %vm633, %v865, 0.0
    %v888 = vadd.f32 %v886, %v887
    %v889 = vsel %vm633, %v866, 0.0
    %v890 = vadd.f32 %v888, %v889
    %v891 = vsel %vm633, %v867, 0.0
    %v892 = vadd.f32 %v890, %v891
    %v893 = vsel %vm633, %v868, 0.0
    %v894 = vadd.f32 %v892, %v893
    %v895 = vsel %vm633, %v869, 0.0
    %v896 = vadd.f32 %v894, %v895
    %v897 = vsel %vm633, %v870, 0.0
    %v898 = vadd.f32 %v896, %v897
    %v899 = vsel %vm633, %v871, 0.0
    %v900 = vadd.f32 %v898, %v899
    %v901 = vsel %vm633, %v872, 0.0
    %v902 = vadd.f32 %v900, %v901
    %v903 = vsel %vm633, %v873, 0.0
    %v904 = vadd.f32 %v902, %v903
    %905 = vadd.xlane.f32.xlu0 %v904
    %v906 = vpop.xlane.xlu0 %905
    %v907 = vrot.slane %v906, 4
    %v908 = vadd.f32 %v906, %v907
    %v909 = vrot.slane %v908, 2
    %v910 = vadd.f32 %v908, %v909
    %v911 = vrot.slane %v910, 1
    %v912 = vadd.f32 %v910, %v911
    %s913 = vtos %v912
    %v914 = vstv %s913
    %915 = vst [vmem:[%s8] sm:$0xff] %v914
  $region41: #{supervised_model_loss.5} parent=0 // pred_fallthru
    _
  // Predicated region
  $region42: #{supervised_model_loss.5} parent=0 // pred_check
    _
  $region43: #{supervised_model_loss.5} parent=0 // pred_check_branch
    %917 = sbr.rel (0) target = $region45
  $region44: #{supervised_model_loss.5} parent=0 // pred_region
    _
  $region45: #{supervised_model_loss.5} parent=0 // pred_fallthru
    _
  // Predicated region
  $region46: #{supervised_model_loss.5} parent=0 // pred_check
    _
  $region47: #{supervised_model_loss.5} parent=0 // pred_check_branch
    %919 = sbr.rel (0) target = $region49
  $region48: #{supervised_model_loss.5} parent=0 // pred_region
    _
  $region49: #{supervised_model_loss.5} parent=0 // pred_fallthru
    _

</llo_original>
